<compile_context>
chip_gen: v7x
topology: tpu7x:2x2x1
jax: 0.10.0
libtpu: 0.0.40
codegen_flags: <defaults>
</compile_context>

<pallas_src>
import functools

import jax
import jax.numpy as jnp
from jax.experimental import pallas as pl
from jax.experimental.pallas import tpu as pltpu


def _round_up(x, m):
    return ((x + m - 1) // m) * m


# ---------------------------------------------------------------------------
# Kernel: the whole MLP for one batch tile.
# Activations are (Rp, TB) with the batch on the 128-wide lane axis, so the
# output tile (Np, TB) is lane-dense and the kernel writes (N, B) directly
# (matching the module's trailing `.T`).
# ---------------------------------------------------------------------------
def _mlp_kernel(x_ref, w1_ref, b1_ref, wh_ref, bh_ref, wf_ref, o_ref, *,
                num_hidden):
    cdt = w1_ref.dtype  # MXU compute dtype (bfloat16 by default)

    def act(z):
        # sigmoid(z) = 1 / (1 + exp(-z)); exp and the approximate reciprocal
        # both execute on the EUP slot, keeping the VALU free.  z stays f32.
        return pl.reciprocal(1.0 + jnp.exp(-z), approx=True)

    # Layer 1.  x arrives in natural (TB, dp) layout (no wrapper transpose);
    # contract the last dims on the MXU: (Rp, dp) x (TB, dp) -> (Rp, TB).
    z = jax.lax.dot_general(
        w1_ref[...], x_ref[...],
        dimension_numbers=(((1,), (1,)), ((), ())),
        preferred_element_type=jnp.float32)
    h = act(z + b1_ref[...]).astype(cdt)

    # Shared-structure hidden layers (static unroll; depth is small).
    # TODO(synk): for production-sized L*R^2 (v7x has only 64 MiB VMEM), move
    # the hidden layers onto a trailing "arbitrary" grid axis so only one
    # (R, R) weight block is VMEM-resident (double-buffered) at a time.
    for l in range(num_hidden):
        z = jnp.dot(wh_ref[l], h, preferred_element_type=jnp.float32)
        h = act(z + bh_ref[l]).astype(cdt)

    # Final layer (no bias): (Np, Rp) @ (Rp, TB) -> (Np, TB).  Lane-dense store.
    o_ref[...] = jnp.dot(
        wf_ref[...], h, preferred_element_type=jnp.float32
    ).astype(o_ref.dtype)


# ---------------------------------------------------------------------------
# Glue: chip info, tiling/VMEM budget, parameter preparation (done once).
# ---------------------------------------------------------------------------
def _chip_info():
    kind = ""
    try:
        kind = jax.devices()[0].device_kind.lower()
    except Exception:
        pass
    if "v5" in kind:            # v5e/v5p: 128 MiB VMEM, 1 TC, 128-wide MXU
        info = dict(lane_mult=128, vmem_phys=128 << 20,
                    scoped_default=16 << 20, num_tc=1)
    elif "v6" in kind:          # v6e: 128 MiB VMEM, 1 TC, 256-wide MXU
        info = dict(lane_mult=256, vmem_phys=128 << 20,
                    scoped_default=32 << 20, num_tc=1)
    elif "v7" in kind or "7x" in kind:   # v7x: 64 MiB VMEM per TC, 2 TCs
        info = dict(lane_mult=256, vmem_phys=64 << 20,
                    scoped_default=32 << 20, num_tc=2)
    else:                       # unknown: be conservative
        info = dict(lane_mult=256, vmem_phys=64 << 20,
                    scoped_default=32 << 20, num_tc=1)
    try:                        # prefer the real VMEM capacity when queryable
        info["vmem_phys"] = int(pltpu.get_tpu_info().vmem_capacity_bytes)
    except Exception:
        pass
    return info


def _choose_tiling(B, dp, Rp, Np, esz, osz, weight_bytes, chip, tile_b):
    """Pick the batch tile from the VMEM budget and compute the VMEM limit."""
    lane = chip["lane_mult"]
    budget = int(0.75 * chip["vmem_phys"])      # headroom for Mosaic scratch
    # Resident bytes per batch column: double-buffered x/out blocks plus the
    # live f32 activations inside the kernel body.
    per_col = 2 * dp * esz + 2 * Np * osz + 3 * Rp * 4
    avail = budget - weight_bytes - (2 << 20)   # weights (single-buffered) + slack
    max_tb = (max(avail, 0) // max(per_col, 1)) // lane * lane
    max_tb = max(lane, min(max_tb, 2048))
    if tile_b is None:
        tile_b = max_tb
    else:
        tile_b = max(lane, min(_round_up(tile_b, lane), max_tb))
    # Don't over-tile tiny batches.
    tile_b = min(tile_b, _round_up(B, lane))
    # v7x: keep >= num_tc grid steps so "parallel" actually feeds both cores.
    if chip["num_tc"] > 1:
        per_core = _round_up(
            -(-_round_up(B, lane) // chip["num_tc"]), lane)
        tile_b = min(tile_b, max(per_core, lane))

    # VMEM limit: only raise above the chip's scoped default when needed,
    # never cap below it, never request more than the headroom budget.
    vmem_needed = int(1.5 * (weight_bytes + tile_b * per_col)) + (2 << 20)
    if vmem_needed > chip["scoped_default"]:
        vmem_limit = min(budget, max(chip["scoped_default"], vmem_needed))
    else:
        vmem_limit = None
    return tile_b, vmem_limit


def prepare_params(w1, b1, wh, bh, wf, *, compute_dtype=jnp.bfloat16):
    """Pad/cast the weights once (hoisted out of the per-call forward path).

    PyTorch Linear layout: w1 (R, d), b1 (R,), wh (L, R, R), bh (L, R),
    wf (N, R) with L = depth - 1.
    """
    R, d = w1.shape
    N = wf.shape[0]
    num_hidden = int(wh.shape[0])
    cdt = compute_dtype
    # Contraction / lane dims padded to 128 (a K<128 matmul costs a full MXU
    # pass anyway); bf16 sublane dims padded to the 16-row pack.
    dp = _round_up(max(d, 1), 128)
    Rp = _round_up(max(R, 1), 128)
    Np = _round_up(max(N, 1), 16)
    Lc = max(num_hidden, 1)                   # keep a non-empty weight stack

    w1_p = jnp.zeros((Rp, dp), cdt).at[:R, :d].set(w1.astype(cdt))
    b1_p = jnp.zeros((Rp, 1), jnp.float32).at[:R, 0].set(b1.astype(jnp.float32))
    wh_p = jnp.zeros((Lc, Rp, Rp), cdt)
    bh_p = jnp.zeros((Lc, Rp, 1), jnp.float32)
    if num_hidden > 0:
        wh_p = wh_p.at[:num_hidden, :R, :R].set(wh.astype(cdt))
        bh_p = bh_p.at[:num_hidden, :R, 0].set(bh.astype(jnp.float32))
    wf_p = jnp.zeros((Np, Rp), cdt).at[:N, :R].set(wf.astype(cdt))

    meta = dict(d=d, R=R, N=N, num_hidden=num_hidden,
                dp=dp, Rp=Rp, Np=Np, Lc=Lc, compute_dtype=cdt)
    return (w1_p, b1_p, wh_p, bh_p, wf_p), meta


# ---------------------------------------------------------------------------
# Forward pass.
# ---------------------------------------------------------------------------
def covnet_deep_shared_forward_prepared(u, prepared, *, tile_b=None,
                                        out_dtype=jnp.float32):
    """Forward with pre-padded weights.  u: (B, d).  Returns (N, B)."""
    (w1_p, b1_p, wh_p, bh_p, wf_p), meta = prepared
    B, d_in = u.shape
    d, R, N = meta["d"], meta["R"], meta["N"]
    dp, Rp, Np, Lc = meta["dp"], meta["Rp"], meta["Np"], meta["Lc"]
    num_hidden = meta["num_hidden"]
    cdt = meta["compute_dtype"]
    assert d_in == d, (d_in, d)

    chip = _chip_info()
    esz = jnp.zeros((), cdt).dtype.itemsize
    osz = jnp.zeros((), out_dtype).dtype.itemsize
    weight_bytes = sum(int(a.size) * a.dtype.itemsize
                       for a in (w1_p, b1_p, wh_p, bh_p, wf_p))

    tile_b, vmem_limit = _choose_tiling(B, dp, Rp, Np, esz, osz,
                                        weight_bytes, chip, tile_b)
    Bp = _round_up(B, tile_b)

    # Pad/cast the batch only when needed; natural (B, d) layout, no transpose.
    if B == Bp and d == dp and u.dtype == cdt:
        x_p = u
    else:
        x_p = jnp.zeros((Bp, dp), cdt).at[:B, :d].set(u.astype(cdt))

    kernel = functools.partial(_mlp_kernel, num_hidden=num_hidden)
    const = pl.Buffered(1)   # weights/biases never change across the batch grid

    y = pl.pallas_call(
        kernel,
        out_shape=jax.ShapeDtypeStruct((Np, Bp), out_dtype),
        grid_spec=pl.GridSpec(
            grid=(Bp // tile_b,),
            in_specs=[
                pl.BlockSpec((tile_b, dp), lambda i: (i, 0)),        # x tile
                pl.BlockSpec((Rp, dp), lambda i: (0, 0),             # W1
                             pipeline_mode=const),
                pl.BlockSpec((Rp, 1), lambda i: (0, 0),              # b1
                             pipeline_mode=const),
                pl.BlockSpec((Lc, Rp, Rp), lambda i: (0, 0, 0),      # hidden W
                             pipeline_mode=const),
                pl.BlockSpec((Lc, Rp, 1), lambda i: (0, 0, 0),       # hidden b
                             pipeline_mode=const),
                pl.BlockSpec((Np, Rp), lambda i: (0, 0),             # Wf
                             pipeline_mode=const),
            ],
            out_specs=pl.BlockSpec((Np, tile_b), lambda i: (0, i)),
        ),
        compiler_params=pltpu.CompilerParams(
            dimension_semantics=("parallel",),
            vmem_limit_bytes=vmem_limit,
        ),
    )(x_p, w1_p, b1_p, wh_p, bh_p, wf_p)

    # Kernel already produced the (N, B) orientation; strip the padding.
    return y[:N, :B]


def covnet_deep_shared_forward(u, w1, b1, wh, bh, wf, *, tile_b=None,
                               compute_dtype=jnp.bfloat16,
                               out_dtype=jnp.float32):
    """Convenience wrapper keeping the raw-weight interface (pads per call)."""
    prepared = prepare_params(w1, b1, wh, bh, wf, compute_dtype=compute_dtype)
    return covnet_deep_shared_forward_prepared(u, prepared, tile_b=tile_b,
                                               out_dtype=out_dtype)


# ---------------------------------------------------------------------------
# Init + reference (pure JAX), matching the PyTorch module.
# ---------------------------------------------------------------------------
def _xavier_normal(key, shape):
    """torch.nn.init.xavier_normal_ for a Linear weight of shape (out, in)."""
    fan_out, fan_in = shape
    std = (2.0 / (fan_in + fan_out)) ** 0.5
    return std * jax.random.normal(key, shape, dtype=jnp.float32)


def init_params(key, d, N, R, depth):
    """Parameter init matching CovNetDeepShared.__init__ (PyTorch layout)."""
    num_hidden = depth - 1
    keys = jax.random.split(key, 2 + max(num_hidden, 1))

    w1 = _xavier_normal(keys[0], (R, d))                  # layer1 weight (R, d)
    b1 = jnp.zeros((R,), jnp.float32)                     # zero bias

    if num_hidden > 0:
        wh = jnp.stack([_xavier_normal(keys[1 + i], (R, R))
                        for i in range(num_hidden)], axis=0)
    else:
        wh = jnp.zeros((0, R, R), jnp.float32)
    bh = jnp.zeros((num_hidden, R), jnp.float32)

    wf = _xavier_normal(keys[-1], (N, R))                 # final layer (N, R)
    return w1, b1, wh, bh, wf


def reference_forward(u, w1, b1, wh, bh, wf, compute_dtype=jnp.bfloat16):
    """Pure-JAX reference of the PyTorch forward (same bf16 compute path)."""
    cdt = compute_dtype
    h = jax.nn.sigmoid(
        jnp.dot(u.astype(cdt), w1.T.astype(cdt),
                preferred_element_type=jnp.float32) + b1[None, :])
    for l in range(wh.shape[0]):
        h = jax.nn.sigmoid(
            jnp.dot(h.astype(cdt), wh[l].T.astype(cdt),
                    preferred_element_type=jnp.float32) + bh[l][None, :])
    y = jnp.dot(h.astype(cdt), wf.T.astype(cdt),
                preferred_element_type=jnp.float32)
    return y.T


if __name__ == "__main__":
    # Small shapes consistent with the module: u is (batch, d).
    d, N, R, depth = 4, 16, 32, 3
    B = 8

    key = jax.random.PRNGKey(0)
    k_params, k_u = jax.random.split(key)

    params = init_params(k_params, d, N, R, depth)
    u = jax.random.normal(k_u, (B, d), dtype=jnp.float32)

    prepared = prepare_params(*params)            # pad/cast weights once
    out = covnet_deep_shared_forward_prepared(u, prepared)
    out = jax.block_until_ready(out)
    assert out.shape == (N, B), out.shape

    ref = reference_forward(u, *params)
    assert jnp.allclose(out, ref, atol=2e-2, rtol=2e-2), float(
        jnp.max(jnp.abs(out - ref)))

    print("KERNEL_OK")
</pallas_src>

<mosaic_0001>
module attributes {stable_mosaic.version = 11 : i64} {
  func.func @_mlp_kernel(%arg0: i32, %arg1: memref<256x128xbf16, #tpu.memory_space<vmem>>, %arg2: memref<128x128xbf16, #tpu.memory_space<vmem>>, %arg3: memref<128x1xf32, #tpu.memory_space<vmem>>, %arg4: memref<2x128x128xbf16, #tpu.memory_space<vmem>>, %arg5: memref<2x128x1xf32, #tpu.memory_space<vmem>>, %arg6: memref<16x128xbf16, #tpu.memory_space<vmem>>, %arg7: memref<16x256xf32, #tpu.memory_space<vmem>>) attributes {dimension_semantics = [#tpu.dimension_semantics<parallel>], iteration_bounds = array<i64: 1>, scalar_prefetch = 0 : i64, scratch_operands = 0 : i64, tpu.core_type = #tpu.core_type<tc>, window_params = [{transform_indices = @transform_0, window_bounds = array<i64: 256, 128>}, {pipeline_mode = #tpu.pipeline_mode<synchronous>, transform_indices = @transform_1, window_bounds = array<i64: 128, 128>}, {pipeline_mode = #tpu.pipeline_mode<synchronous>, transform_indices = @transform_2, window_bounds = array<i64: 128, 1>}, {pipeline_mode = #tpu.pipeline_mode<synchronous>, transform_indices = @transform_3, window_bounds = array<i64: 2, 128, 128>}, {pipeline_mode = #tpu.pipeline_mode<synchronous>, transform_indices = @transform_4, window_bounds = array<i64: 2, 128, 1>}, {pipeline_mode = #tpu.pipeline_mode<synchronous>, transform_indices = @transform_5, window_bounds = array<i64: 16, 128>}, {transform_indices = @transform_6, window_bounds = array<i64: 16, 256>}]} {
    %c0 = arith.constant 0 : index
    %c0_0 = arith.constant 0 : index
    %0 = vector.load %arg2[%c0, %c0_0] : memref<128x128xbf16, #tpu.memory_space<vmem>>, vector<128x128xbf16>
    %c0_1 = arith.constant 0 : index
    %c0_2 = arith.constant 0 : index
    %1 = vector.load %arg1[%c0_1, %c0_2] : memref<256x128xbf16, #tpu.memory_space<vmem>>, vector<256x128xbf16>
    %cst = arith.constant dense<0.000000e+00> : vector<128x256xf32>
    %2 = tpu.matmul %0, %1, %cst {dimension_numbers = #tpu.dot_dimension_numbers<[1], [1], [0], [0], [0, 0, 1, 0], [], []>} : vector<128x128xbf16>, vector<256x128xbf16>, vector<128x256xf32> -> vector<128x256xf32>
    %c0_3 = arith.constant 0 : index
    %c0_4 = arith.constant 0 : index
    %3 = vector.load %arg3[%c0_3, %c0_4] : memref<128x1xf32, #tpu.memory_space<vmem>>, vector<128x1xf32>
    %4 = vector.broadcast %3 : vector<128x1xf32> to vector<128x256xf32>
    %5 = arith.addf %2, %4 : vector<128x256xf32>
    %cst_5 = arith.constant 0.000000e+00 : f32
    %6 = vector.broadcast %cst_5 : f32 to vector<128x256xf32>
    %7 = arith.subf %6, %5 : vector<128x256xf32>
    %8 = math.exp %7 : vector<128x256xf32>
    %cst_6 = arith.constant 1.000000e+00 : f32
    %9 = vector.broadcast %cst_6 : f32 to vector<128x256xf32>
    %10 = arith.addf %9, %8 : vector<128x256xf32>
    %11 = tpu.reciprocal %10 {approx = true} : vector<128x256xf32> -> vector<128x256xf32>
    %12 = arith.truncf %11 : vector<128x256xf32> to vector<128x256xbf16>
    %c0_7 = arith.constant 0 : index
    %c0_8 = arith.constant 0 : index
    %c0_9 = arith.constant 0 : index
    %13 = vector.load %arg4[%c0_7, %c0_8, %c0_9] : memref<2x128x128xbf16, #tpu.memory_space<vmem>>, vector<1x128x128xbf16>
    %14 = vector.shape_cast %13 : vector<1x128x128xbf16> to vector<128x128xbf16>
    %cst_10 = arith.constant dense<0.000000e+00> : vector<128x256xf32>
    %15 = tpu.matmul %14, %12, %cst_10 {dimension_numbers = #tpu.dot_dimension_numbers<[1], [0], [0], [1], [0, 0, 1, 1], [], []>} : vector<128x128xbf16>, vector<128x256xbf16>, vector<128x256xf32> -> vector<128x256xf32>
    %c0_11 = arith.constant 0 : index
    %c0_12 = arith.constant 0 : index
    %c0_13 = arith.constant 0 : index
    %16 = vector.load %arg5[%c0_11, %c0_12, %c0_13] : memref<2x128x1xf32, #tpu.memory_space<vmem>>, vector<1x128x1xf32>
    %17 = vector.shape_cast %16 : vector<1x128x1xf32> to vector<128x1xf32>
    %18 = vector.broadcast %17 : vector<128x1xf32> to vector<128x256xf32>
    %19 = arith.addf %15, %18 : vector<128x256xf32>
    %cst_14 = arith.constant 0.000000e+00 : f32
    %20 = vector.broadcast %cst_14 : f32 to vector<128x256xf32>
    %21 = arith.subf %20, %19 : vector<128x256xf32>
    %22 = math.exp %21 : vector<128x256xf32>
    %cst_15 = arith.constant 1.000000e+00 : f32
    %23 = vector.broadcast %cst_15 : f32 to vector<128x256xf32>
    %24 = arith.addf %23, %22 : vector<128x256xf32>
    %25 = tpu.reciprocal %24 {approx = true} : vector<128x256xf32> -> vector<128x256xf32>
    %26 = arith.truncf %25 : vector<128x256xf32> to vector<128x256xbf16>
    %c1 = arith.constant 1 : index
    %c0_16 = arith.constant 0 : index
    %c0_17 = arith.constant 0 : index
    %27 = vector.load %arg4[%c1, %c0_16, %c0_17] : memref<2x128x128xbf16, #tpu.memory_space<vmem>>, vector<1x128x128xbf16>
    %28 = vector.shape_cast %27 : vector<1x128x128xbf16> to vector<128x128xbf16>
    %cst_18 = arith.constant dense<0.000000e+00> : vector<128x256xf32>
    %29 = tpu.matmul %28, %26, %cst_18 {dimension_numbers = #tpu.dot_dimension_numbers<[1], [0], [0], [1], [0, 0, 1, 1], [], []>} : vector<128x128xbf16>, vector<128x256xbf16>, vector<128x256xf32> -> vector<128x256xf32>
    %c1_19 = arith.constant 1 : index
    %c0_20 = arith.constant 0 : index
    %c0_21 = arith.constant 0 : index
    %30 = vector.load %arg5[%c1_19, %c0_20, %c0_21] : memref<2x128x1xf32, #tpu.memory_space<vmem>>, vector<1x128x1xf32>
    %31 = vector.shape_cast %30 : vector<1x128x1xf32> to vector<128x1xf32>
    %32 = vector.broadcast %31 : vector<128x1xf32> to vector<128x256xf32>
    %33 = arith.addf %29, %32 : vector<128x256xf32>
    %cst_22 = arith.constant 0.000000e+00 : f32
    %34 = vector.broadcast %cst_22 : f32 to vector<128x256xf32>
    %35 = arith.subf %34, %33 : vector<128x256xf32>
    %36 = math.exp %35 : vector<128x256xf32>
    %cst_23 = arith.constant 1.000000e+00 : f32
    %37 = vector.broadcast %cst_23 : f32 to vector<128x256xf32>
    %38 = arith.addf %37, %36 : vector<128x256xf32>
    %39 = tpu.reciprocal %38 {approx = true} : vector<128x256xf32> -> vector<128x256xf32>
    %40 = arith.truncf %39 : vector<128x256xf32> to vector<128x256xbf16>
    %c0_24 = arith.constant 0 : index
    %c0_25 = arith.constant 0 : index
    %41 = vector.load %arg6[%c0_24, %c0_25] : memref<16x128xbf16, #tpu.memory_space<vmem>>, vector<16x128xbf16>
    %cst_26 = arith.constant dense<0.000000e+00> : vector<16x256xf32>
    %42 = tpu.matmul %41, %40, %cst_26 {dimension_numbers = #tpu.dot_dimension_numbers<[1], [0], [0], [1], [0, 0, 1, 1], [], []>} : vector<16x128xbf16>, vector<128x256xbf16>, vector<16x256xf32> -> vector<16x256xf32>
    %c0_27 = arith.constant 0 : index
    %c0_28 = arith.constant 0 : index
    %43 = vector.load %arg7[%c0_27, %c0_28] : memref<16x256xf32, #tpu.memory_space<vmem>>, vector<16x256xf32>
    tpu.vector_store %arg7[%c0_27, %c0_28], %42 {strides = array<i32>} : memref<16x256xf32, #tpu.memory_space<vmem>>, vector<16x256xf32>,
    return
  }
  func.func @transform_0(%arg0: i32) -> (i32, i32) {
    %c0_i32 = arith.constant 0 : i32
    %c0_i32_0 = arith.constant 0 : i32
    return %arg0, %c0_i32 : i32, i32
  }
  func.func @transform_1(%arg0: i32) -> (i32, i32) {
    %c0_i32 = arith.constant 0 : i32
    %c0_i32_0 = arith.constant 0 : i32
    %c0_i32_1 = arith.constant 0 : i32
    return %c0_i32, %c0_i32_0 : i32, i32
  }
  func.func @transform_2(%arg0: i32) -> (i32, i32) {
    %c0_i32 = arith.constant 0 : i32
    %c0_i32_0 = arith.constant 0 : i32
    %c0_i32_1 = arith.constant 0 : i32
    return %c0_i32, %c0_i32_0 : i32, i32
  }
  func.func @transform_3(%arg0: i32) -> (i32, i32, i32) {
    %c0_i32 = arith.constant 0 : i32
    %c0_i32_0 = arith.constant 0 : i32
    %c0_i32_1 = arith.constant 0 : i32
    %c0_i32_2 = arith.constant 0 : i32
    return %c0_i32, %c0_i32_0, %c0_i32_1 : i32, i32, i32
  }
  func.func @transform_4(%arg0: i32) -> (i32, i32, i32) {
    %c0_i32 = arith.constant 0 : i32
    %c0_i32_0 = arith.constant 0 : i32
    %c0_i32_1 = arith.constant 0 : i32
    %c0_i32_2 = arith.constant 0 : i32
    return %c0_i32, %c0_i32_0, %c0_i32_1 : i32, i32, i32
  }
  func.func @transform_5(%arg0: i32) -> (i32, i32) {
    %c0_i32 = arith.constant 0 : i32
    %c0_i32_0 = arith.constant 0 : i32
    %c0_i32_1 = arith.constant 0 : i32
    return %c0_i32, %c0_i32_0 : i32, i32
  }
  func.func @transform_6(%arg0: i32) -> (i32, i32) {
    %c0_i32 = arith.constant 0 : i32
    %c0_i32_0 = arith.constant 0 : i32
    return %c0_i32, %arg0 : i32, i32
  }
}

</mosaic_0001>

<llo_original>
// kernel: tpu_custom_call.1
$region0: #{tpu_custom_call.1}
  #allocation0 [shape = 'u32[]', space=smem, size = 0x4, offset = 0x4, fixed_abs, tag = 'smem constant byte address 0x4 - core index']
  #allocation1 [shape = 'u32[144,128]{1,0:T(1,128)}', space=vmem, size = 0x12000, scoped, tag = 'internal scratch']
  %s0 = inlined_call_operand.vmem [shape: bf16[256,128], index: 0, kind: input, shape index: {}]
  %s1 = inlined_call_operand.vmem [shape: bf16[128,128], index: 1, kind: input, shape index: {}]
  %s2 = inlined_call_operand.vmem [shape: f32[128,1], index: 2, kind: input, shape index: {}]
  %s3 = inlined_call_operand.vmem [shape: bf16[2,128,128], index: 3, kind: input, shape index: {}]
  %s4 = inlined_call_operand.vmem [shape: f32[2,128,1], index: 4, kind: input, shape index: {}]
  %s5 = inlined_call_operand.vmem [shape: bf16[16,128], index: 5, kind: input, shape index: {}]
  %s6 = inlined_call_operand.hbm [shape: f32[16,256], index: 6, kind: output, shape index: {}]
  %s7 = sld [smem:[#allocation0]]
  $region34: #{tpu_custom_call.1} parent=0
    _
  %s9 = ssub.s32 1, %s7
  %s10 = scalar_select 0, %s9, %s7
  $region1: #{tpu_custom_call.1} parent=0
    #allocation2 [shape = 'u8[16384]{0}', space=vmem, size = 0x4000, scoped, tag = 'output window, operand 0, single buffered']
    #allocation3 [shape = 's32[1]{0}', space=sflag, size = 0x4, scoped, tag = 'scoped memory for tpu_custom_call.1']
    %11 = vsyncpa [#allocation3], 0
    // Predicated region
    $region2: #{tpu_custom_call.1} parent=1 // pred_check
      _
    $region3: #{tpu_custom_call.1} parent=1 // pred_check_branch
      %13 = sbr.rel (0) target = $region5
    $region4: #{tpu_custom_call.1} parent=1 // pred_region
      _
    $region5: #{tpu_custom_call.1} parent=1 // pred_fallthru
      _
    // Predicated region
    $region6: #{tpu_custom_call.1} parent=1 // pred_check
      _
    $region7: #{tpu_custom_call.1} parent=1 // pred_check_branch
      %15 = sbr.rel (0) target = $region9
    $region8: #{tpu_custom_call.1} parent=1 // pred_region
      _
    $region9: #{tpu_custom_call.1} parent=1 // pred_fallthru
      _
    // Predicated region
    $region10: #{tpu_custom_call.1} parent=1 // pred_check
      _
    $region11: #{tpu_custom_call.1} parent=1 // pred_check_branch
      %17 = sbr.rel (0) target = $region13
    $region12: #{tpu_custom_call.1} parent=1 // pred_region
      _
    $region13: #{tpu_custom_call.1} parent=1 // pred_fallthru
      _
    // Predicated region
    $region14: #{tpu_custom_call.1} parent=1 // pred_check
      _
    $region15: #{tpu_custom_call.1} parent=1 // pred_check_branch
      %19 = sbr.rel (0) target = $region17
    $region16: #{tpu_custom_call.1} parent=1 // pred_region
      _
    $region17: #{tpu_custom_call.1} parent=1 // pred_fallthru
      _
    // Predicated region
    $region18: #{tpu_custom_call.1} parent=1 // pred_check
      _
    $region19: #{tpu_custom_call.1} parent=1 // pred_check_branch
      %21 = sbr.rel (0) target = $region21
    $region20: #{tpu_custom_call.1} parent=1 // pred_region
      _
    $region21: #{tpu_custom_call.1} parent=1 // pred_fallthru
      _
    // Predicated region
    $region22: #{tpu_custom_call.1} parent=1 // pred_check
      _
    $region23: #{tpu_custom_call.1} parent=1 // pred_check_branch
      %23 = sbr.rel (0) target = $region25
    $region24: #{tpu_custom_call.1} parent=1 // pred_region
      _
    $region25: #{tpu_custom_call.1} parent=1 // pred_fallthru
      _
    %v25 = vld [vmem:[%s1] sm:$0xf]
    %v26 = vld [vmem:[%s1 + $0x4] sm:$0xf]
    %v27 = vld [vmem:[%s1 + $0x8] sm:$0xf]
    %v28 = vld [vmem:[%s1 + $0xc] sm:$0xf]
    %v29 = vld [vmem:[%s1 + $0x10] sm:$0xf]
    %v30 = vld [vmem:[%s1 + $0x14] sm:$0xf]
    %v31 = vld [vmem:[%s1 + $0x18] sm:$0xf]
    %v32 = vld [vmem:[%s1 + $0x1c] sm:$0xf]
    %v33 = vld [vmem:[%s1 + $0x20] sm:$0xf]
    %v34 = vld [vmem:[%s1 + $0x24] sm:$0xf]
    %v35 = vld [vmem:[%s1 + $0x28] sm:$0xf]
    %v36 = vld [vmem:[%s1 + $0x2c] sm:$0xf]
    %v37 = vld [vmem:[%s1 + $0x30] sm:$0xf]
    %v38 = vld [vmem:[%s1 + $0x34] sm:$0xf]
    %v39 = vld [vmem:[%s1 + $0x38] sm:$0xf]
    %v40 = vld [vmem:[%s1 + $0x3c] sm:$0xf]
    %v41 = vld [vmem:[%s0] sm:$0xf]
    %v42 = vld [vmem:[%s0 + $0x4] sm:$0xf]
    %v43 = vld [vmem:[%s0 + $0x8] sm:$0xf]
    %v44 = vld [vmem:[%s0 + $0xc] sm:$0xf]
    %v45 = vld [vmem:[%s0 + $0x10] sm:$0xf]
    %v46 = vld [vmem:[%s0 + $0x14] sm:$0xf]
    %v47 = vld [vmem:[%s0 + $0x18] sm:$0xf]
    %v48 = vld [vmem:[%s0 + $0x1c] sm:$0xf]
    %v49 = vld [vmem:[%s0 + $0x20] sm:$0xf]
    %v50 = vld [vmem:[%s0 + $0x24] sm:$0xf]
    %v51 = vld [vmem:[%s0 + $0x28] sm:$0xf]
    %v52 = vld [vmem:[%s0 + $0x2c] sm:$0xf]
    %v53 = vld [vmem:[%s0 + $0x30] sm:$0xf]
    %v54 = vld [vmem:[%s0 + $0x34] sm:$0xf]
    %v55 = vld [vmem:[%s0 + $0x38] sm:$0xf]
    %v56 = vld [vmem:[%s0 + $0x3c] sm:$0xf]
    %v57 = vld [vmem:[%s0 + $0x40] sm:$0xf]
    %v58 = vld [vmem:[%s0 + $0x44] sm:$0xf]
    %v59 = vld [vmem:[%s0 + $0x48] sm:$0xf]
    %v60 = vld [vmem:[%s0 + $0x4c] sm:$0xf]
    %v61 = vld [vmem:[%s0 + $0x50] sm:$0xf]
    %v62 = vld [vmem:[%s0 + $0x54] sm:$0xf]
    %v63 = vld [vmem:[%s0 + $0x58] sm:$0xf]
    %v64 = vld [vmem:[%s0 + $0x5c] sm:$0xf]
    %v65 = vld [vmem:[%s0 + $0x60] sm:$0xf]
    %v66 = vld [vmem:[%s0 + $0x64] sm:$0xf]
    %v67 = vld [vmem:[%s0 + $0x68] sm:$0xf]
    %v68 = vld [vmem:[%s0 + $0x6c] sm:$0xf]
    %v69 = vld [vmem:[%s0 + $0x70] sm:$0xf]
    %v70 = vld [vmem:[%s0 + $0x74] sm:$0xf]
    %v71 = vld [vmem:[%s0 + $0x78] sm:$0xf]
    %v72 = vld [vmem:[%s0 + $0x7c] sm:$0xf]
    %v73 = vld [vmem:[%s2] sm:$0xff]
    %v74 = vld [vmem:[%s2 + $0x8] sm:$0xff]
    %v75 = vld [vmem:[%s2 + $0x10] sm:$0xff]
    %v76 = vld [vmem:[%s2 + $0x18] sm:$0xff]
    %v77 = vld [vmem:[%s2 + $0x20] sm:$0xff]
    %v78 = vld [vmem:[%s2 + $0x28] sm:$0xff]
    %v79 = vld [vmem:[%s2 + $0x30] sm:$0xff]
    %v80 = vld [vmem:[%s2 + $0x38] sm:$0xff]
    %v81 = vld [vmem:[%s2 + $0x40] sm:$0xff]
    %v82 = vld [vmem:[%s2 + $0x48] sm:$0xff]
    %v83 = vld [vmem:[%s2 + $0x50] sm:$0xff]
    %v84 = vld [vmem:[%s2 + $0x58] sm:$0xff]
    %v85 = vld [vmem:[%s2 + $0x60] sm:$0xff]
    %v86 = vld [vmem:[%s2 + $0x68] sm:$0xff]
    %v87 = vld [vmem:[%s2 + $0x70] sm:$0xff]
    %v88 = vld [vmem:[%s2 + $0x78] sm:$0xff]
    %90 = vset.pattern.permute.xlu0 0
    %91 = vperm.xlu0 %90, %v73
    %v92 = vpop.permute.xlu0 %91
    %95 = vset.pattern.permute.xlu0 0
    %96 = vperm.xlu0 %95, %v74
    %v97 = vpop.permute.xlu0 %96
    %100 = vset.pattern.permute.xlu0 0
    %101 = vperm.xlu0 %100, %v75
    %v102 = vpop.permute.xlu0 %101
    %105 = vset.pattern.permute.xlu0 0
    %106 = vperm.xlu0 %105, %v76
    %v107 = vpop.permute.xlu0 %106
    %110 = vset.pattern.permute.xlu0 0
    %111 = vperm.xlu0 %110, %v77
    %v112 = vpop.permute.xlu0 %111
    %115 = vset.pattern.permute.xlu0 0
    %116 = vperm.xlu0 %115, %v78
    %v117 = vpop.permute.xlu0 %116
    %120 = vset.pattern.permute.xlu0 0
    %121 = vperm.xlu0 %120, %v79
    %v122 = vpop.permute.xlu0 %121
    %125 = vset.pattern.permute.xlu0 0
    %126 = vperm.xlu0 %125, %v80
    %v127 = vpop.permute.xlu0 %126
    %130 = vset.pattern.permute.xlu0 0
    %131 = vperm.xlu0 %130, %v81
    %v132 = vpop.permute.xlu0 %131
    %135 = vset.pattern.permute.xlu0 0
    %136 = vperm.xlu0 %135, %v82
    %v137 = vpop.permute.xlu0 %136
    %140 = vset.pattern.permute.xlu0 0
    %141 = vperm.xlu0 %140, %v83
    %v142 = vpop.permute.xlu0 %141
    %145 = vset.pattern.permute.xlu0 0
    %146 = vperm.xlu0 %145, %v84
    %v147 = vpop.permute.xlu0 %146
    %150 = vset.pattern.permute.xlu0 0
    %151 = vperm.xlu0 %150, %v85
    %v152 = vpop.permute.xlu0 %151
    %155 = vset.pattern.permute.xlu0 0
    %156 = vperm.xlu0 %155, %v86
    %v157 = vpop.permute.xlu0 %156
    %160 = vset.pattern.permute.xlu0 0
    %161 = vperm.xlu0 %160, %v87
    %v162 = vpop.permute.xlu0 %161
    %165 = vset.pattern.permute.xlu0 0
    %166 = vperm.xlu0 %165, %v88
    %v167 = vpop.permute.xlu0 %166
    %v185 = vunpack.c.l.b16 %v25
    %v186 = vunpack.c.l.b16 %v26
    %v187 = vunpack.c.l.b16 %v27
    %v188 = vunpack.c.l.b16 %v28
    %v189 = vunpack.c.l.b16 %v29
    %v190 = vunpack.c.l.b16 %v30
    %v191 = vunpack.c.l.b16 %v31
    %v192 = vunpack.c.l.b16 %v32
    %v193 = vunpack.c.l.b16 %v33
    %v194 = vunpack.c.l.b16 %v34
    %v195 = vunpack.c.l.b16 %v35
    %v196 = vunpack.c.l.b16 %v36
    %v197 = vunpack.c.l.b16 %v37
    %v198 = vunpack.c.l.b16 %v38
    %v199 = vunpack.c.l.b16 %v39
    %v200 = vunpack.c.l.b16 %v40
    %v201 = vpack.c.b16 %v186, %v185
    %v202 = vpack.c.b16 %v188, %v187
    %v203 = vpack.c.b16 %v190, %v189
    %v204 = vpack.c.b16 %v192, %v191
    %v205 = vpack.c.b16 %v194, %v193
    %v206 = vpack.c.b16 %v196, %v195
    %v207 = vpack.c.b16 %v198, %v197
    %v208 = vpack.c.b16 %v200, %v199
    %v249 = vunpack.c.l.b16 %v41
    %v250 = vunpack.c.l.b16 %v42
    %v251 = vunpack.c.l.b16 %v43
    %v252 = vunpack.c.l.b16 %v44
    %v253 = vunpack.c.l.b16 %v45
    %v254 = vunpack.c.l.b16 %v46
    %v255 = vunpack.c.l.b16 %v47
    %v256 = vunpack.c.l.b16 %v48
    %v257 = vunpack.c.l.b16 %v49
    %v258 = vunpack.c.l.b16 %v50
    %v259 = vunpack.c.l.b16 %v51
    %v260 = vunpack.c.l.b16 %v52
    %v261 = vunpack.c.l.b16 %v53
    %v262 = vunpack.c.l.b16 %v54
    %v263 = vunpack.c.l.b16 %v55
    %v264 = vunpack.c.l.b16 %v56
    %v265 = vunpack.c.l.b16 %v57
    %v266 = vunpack.c.l.b16 %v58
    %v267 = vunpack.c.l.b16 %v59
    %v268 = vunpack.c.l.b16 %v60
    %v269 = vunpack.c.l.b16 %v61
    %v270 = vunpack.c.l.b16 %v62
    %v271 = vunpack.c.l.b16 %v63
    %v272 = vunpack.c.l.b16 %v64
    %v273 = vunpack.c.l.b16 %v65
    %v274 = vunpack.c.l.b16 %v66
    %v275 = vunpack.c.l.b16 %v67
    %v276 = vunpack.c.l.b16 %v68
    %v277 = vunpack.c.l.b16 %v69
    %v278 = vunpack.c.l.b16 %v70
    %v279 = vunpack.c.l.b16 %v71
    %v280 = vunpack.c.l.b16 %v72
    %v281 = vpack.c.b16 %v250, %v249
    %v282 = vpack.c.b16 %v252, %v251
    %v283 = vpack.c.b16 %v254, %v253
    %v284 = vpack.c.b16 %v256, %v255
    %v285 = vpack.c.b16 %v258, %v257
    %v286 = vpack.c.b16 %v260, %v259
    %v287 = vpack.c.b16 %v262, %v261
    %v288 = vpack.c.b16 %v264, %v263
    %v289 = vpack.c.b16 %v266, %v265
    %v290 = vpack.c.b16 %v268, %v267
    %v291 = vpack.c.b16 %v270, %v269
    %v292 = vpack.c.b16 %v272, %v271
    %v293 = vpack.c.b16 %v274, %v273
    %v294 = vpack.c.b16 %v276, %v275
    %v295 = vpack.c.b16 %v278, %v277
    %v296 = vpack.c.b16 %v280, %v279
    %313 = vmatprep.subr.bf16.mxu0 0
    %314 = vmatpush1.bf16.xpose.msra.mxu0 %v281
    %315 = vmatprep.subr.bf16.mxu0 0
    %316 = vmatpush1.bf16.xpose.msra.mxu0 %v282
    %317 = vmatprep.subr.bf16.mxu0 0
    %318 = vmatpush1.bf16.xpose.msra.mxu0 %v283
    %319 = vmatprep.subr.bf16.mxu0 0
    %320 = vmatpush1.bf16.xpose.msra.mxu0 %v284
    %321 = vmatprep.subr.bf16.mxu0 0
    %322 = vmatpush1.bf16.xpose.msra.mxu0 %v285
    %323 = vmatprep.subr.bf16.mxu0 0
    %324 = vmatpush1.bf16.xpose.msra.mxu0 %v286
    %325 = vmatprep.subr.bf16.mxu0 0
    %326 = vmatpush1.bf16.xpose.msra.mxu0 %v287
    %327 = vmatprep.subr.bf16.mxu0 0
    %328 = vmatpush1.bf16.xpose.msra.mxu0 %v288
    %329 = vmatprep.subr.bf16.mxu0 0
    %330 = vmatpush1.bf16.xpose.msra.mxu0 %v289
    %331 = vmatprep.subr.bf16.mxu0 0
    %332 = vmatpush1.bf16.xpose.msra.mxu0 %v290
    %333 = vmatprep.subr.bf16.mxu0 0
    %334 = vmatpush1.bf16.xpose.msra.mxu0 %v291
    %335 = vmatprep.subr.bf16.mxu0 0
    %336 = vmatpush1.bf16.xpose.msra.mxu0 %v292
    %337 = vmatprep.subr.bf16.mxu0 0
    %338 = vmatpush1.bf16.xpose.msra.mxu0 %v293
    %339 = vmatprep.subr.bf16.mxu0 0
    %340 = vmatpush1.bf16.xpose.msra.mxu0 %v294
    %341 = vmatprep.subr.bf16.mxu0 0
    %342 = vmatpush1.bf16.xpose.msra.mxu0 %v295
    %343 = vmatprep.subr.bf16.mxu0 0
    %344 = vmatpush1.bf16.xpose.msra.mxu0 %v296
    %345 = vmatprep.mubr.bf16.mxu0 0
    %346 = vmatmul.mubr.bf16.gmra.mrb[0].mxu0 %v201
    %v347 = vpop.f32.mrb[0].mxu0
    %v348 = vadd.f32 %v92, %v347
    %v349 = vpop.f32.mrb[0].mxu0
    %v350 = vadd.f32 %v92, %v349
    %v351 = vpop.f32.mrb[0].mxu0
    %v352 = vadd.f32 %v97, %v351
    %v353 = vpop.f32.mrb[0].mxu0
    %v354 = vadd.f32 %v97, %v353
    %355 = vmatprep.mubr.bf16.mxu0 0
    %356 = vmatmul.mubr.bf16.gmra.mrb[0].mxu0 %v202
    %v357 = vpop.f32.mrb[0].mxu0
    %v358 = vadd.f32 %v102, %v357
    %v359 = vpop.f32.mrb[0].mxu0
    %v360 = vadd.f32 %v102, %v359
    %v361 = vpop.f32.mrb[0].mxu0
    %v362 = vadd.f32 %v107, %v361
    %v363 = vpop.f32.mrb[0].mxu0
    %v364 = vadd.f32 %v107, %v363
    %365 = vmatprep.mubr.bf16.mxu0 0
    %366 = vmatmul.mubr.bf16.gmra.mrb[0].mxu0 %v203
    %v367 = vpop.f32.mrb[0].mxu0
    %v368 = vadd.f32 %v112, %v367
    %v369 = vpop.f32.mrb[0].mxu0
    %v370 = vadd.f32 %v112, %v369
    %v371 = vpop.f32.mrb[0].mxu0
    %v372 = vadd.f32 %v117, %v371
    %v373 = vpop.f32.mrb[0].mxu0
    %v374 = vadd.f32 %v117, %v373
    %375 = vmatprep.mubr.bf16.mxu0 0
    %376 = vmatmul.mubr.bf16.gmra.mrb[0].mxu0 %v204
    %v377 = vpop.f32.mrb[0].mxu0
    %v378 = vadd.f32 %v122, %v377
    %v379 = vpop.f32.mrb[0].mxu0
    %v380 = vadd.f32 %v122, %v379
    %v381 = vpop.f32.mrb[0].mxu0
    %v382 = vadd.f32 %v127, %v381
    %v383 = vpop.f32.mrb[0].mxu0
    %v384 = vadd.f32 %v127, %v383
    %385 = vmatprep.mubr.bf16.mxu0 0
    %386 = vmatmul.mubr.bf16.gmra.mrb[0].mxu0 %v205
    %v387 = vpop.f32.mrb[0].mxu0
    %v388 = vadd.f32 %v132, %v387
    %v389 = vpop.f32.mrb[0].mxu0
    %v390 = vadd.f32 %v132, %v389
    %v391 = vpop.f32.mrb[0].mxu0
    %v392 = vadd.f32 %v137, %v391
    %v393 = vpop.f32.mrb[0].mxu0
    %v394 = vadd.f32 %v137, %v393
    %395 = vmatprep.mubr.bf16.mxu0 0
    %396 = vmatmul.mubr.bf16.gmra.mrb[0].mxu0 %v206
    %v397 = vpop.f32.mrb[0].mxu0
    %v398 = vadd.f32 %v142, %v397
    %v399 = vpop.f32.mrb[0].mxu0
    %v400 = vadd.f32 %v142, %v399
    %v401 = vpop.f32.mrb[0].mxu0
    %v402 = vadd.f32 %v147, %v401
    %v403 = vpop.f32.mrb[0].mxu0
    %v404 = vadd.f32 %v147, %v403
    %405 = vmatprep.mubr.bf16.mxu0 0
    %406 = vmatmul.mubr.bf16.gmra.mrb[0].mxu0 %v207
    %v407 = vpop.f32.mrb[0].mxu0
    %v408 = vadd.f32 %v152, %v407
    %v409 = vpop.f32.mrb[0].mxu0
    %v410 = vadd.f32 %v152, %v409
    %v411 = vpop.f32.mrb[0].mxu0
    %v412 = vadd.f32 %v157, %v411
    %v413 = vpop.f32.mrb[0].mxu0
    %v414 = vadd.f32 %v157, %v413
    %415 = vmatprep.mubr.bf16.mxu0 0
    %416 = vmatmul.mubr.bf16.gmra.mrb[0].mxu0 %v208
    %v417 = vpop.f32.mrb[0].mxu0
    %v418 = vadd.f32 %v162, %v417
    %v419 = vpop.f32.mrb[0].mxu0
    %v420 = vadd.f32 %v162, %v419
    %v421 = vpop.f32.mrb[0].mxu0
    %v422 = vadd.f32 %v167, %v421
    %v423 = vpop.f32.mrb[0].mxu0
    %v424 = vadd.f32 %v167, %v423
    %425 = vdwg.mxu0
    %v426 = vsub.f32 0.0, %v348
    %v427 = vsub.f32 0.0, %v350
    %v428 = vsub.f32 0.0, %v352
    %v429 = vsub.f32 0.0, %v354
    %v430 = vsub.f32 0.0, %v358
    %v431 = vsub.f32 0.0, %v360
    %v432 = vsub.f32 0.0, %v362
    %v433 = vsub.f32 0.0, %v364
    %v434 = vsub.f32 0.0, %v368
    %v435 = vsub.f32 0.0, %v370
    %v436 = vsub.f32 0.0, %v372
    %v437 = vsub.f32 0.0, %v374
    %v438 = vsub.f32 0.0, %v378
    %v439 = vsub.f32 0.0, %v380
    %v440 = vsub.f32 0.0, %v382
    %v441 = vsub.f32 0.0, %v384
    %v442 = vsub.f32 0.0, %v388
    %v443 = vsub.f32 0.0, %v390
    %v444 = vsub.f32 0.0, %v392
    %v445 = vsub.f32 0.0, %v394
    %v446 = vsub.f32 0.0, %v398
    %v447 = vsub.f32 0.0, %v400
    %v448 = vsub.f32 0.0, %v402
    %v449 = vsub.f32 0.0, %v404
    %v450 = vsub.f32 0.0, %v408
    %v451 = vsub.f32 0.0, %v410
    %v452 = vsub.f32 0.0, %v412
    %v453 = vsub.f32 0.0, %v414
    %v454 = vsub.f32 0.0, %v418
    %v455 = vsub.f32 0.0, %v420
    %v456 = vsub.f32 0.0, %v422
    %v457 = vsub.f32 0.0, %v424
    %v458 = vmul.f32 %v426, 1.442695
    %v459 = vpow.pop %v458
    %v460 = vmul.f32 %v427, 1.442695
    %v461 = vpow.pop %v460
    %v462 = vmul.f32 %v428, 1.442695
    %v463 = vpow.pop %v462
    %v464 = vmul.f32 %v429, 1.442695
    %v465 = vpow.pop %v464
    %v466 = vmul.f32 %v430, 1.442695
    %v467 = vpow.pop %v466
    %v468 = vmul.f32 %v431, 1.442695
    %v469 = vpow.pop %v468
    %v470 = vmul.f32 %v432, 1.442695
    %v471 = vpow.pop %v470
    %v472 = vmul.f32 %v433, 1.442695
    %v473 = vpow.pop %v472
    %v474 = vmul.f32 %v434, 1.442695
    %v475 = vpow.pop %v474
    %v476 = vmul.f32 %v435, 1.442695
    %v477 = vpow.pop %v476
    %v478 = vmul.f32 %v436, 1.442695
    %v479 = vpow.pop %v478
    %v480 = vmul.f32 %v437, 1.442695
    %v481 = vpow.pop %v480
    %v482 = vmul.f32 %v438, 1.442695
    %v483 = vpow.pop %v482
    %v484 = vmul.f32 %v439, 1.442695
    %v485 = vpow.pop %v484
    %v486 = vmul.f32 %v440, 1.442695
    %v487 = vpow.pop %v486
    %v488 = vmul.f32 %v441, 1.442695
    %v489 = vpow.pop %v488
    %v490 = vmul.f32 %v442, 1.442695
    %v491 = vpow.pop %v490
    %v492 = vmul.f32 %v443, 1.442695
    %v493 = vpow.pop %v492
    %v494 = vmul.f32 %v444, 1.442695
    %v495 = vpow.pop %v494
    %v496 = vmul.f32 %v445, 1.442695
    %v497 = vpow.pop %v496
    %v498 = vmul.f32 %v446, 1.442695
    %v499 = vpow.pop %v498
    %v500 = vmul.f32 %v447, 1.442695
    %v501 = vpow.pop %v500
    %v502 = vmul.f32 %v448, 1.442695
    %v503 = vpow.pop %v502
    %v504 = vmul.f32 %v449, 1.442695
    %v505 = vpow.pop %v504
    %v506 = vmul.f32 %v450, 1.442695
    %v507 = vpow.pop %v506
    %v508 = vmul.f32 %v451, 1.442695
    %v509 = vpow.pop %v508
    %v510 = vmul.f32 %v452, 1.442695
    %v511 = vpow.pop %v510
    %v512 = vmul.f32 %v453, 1.442695
    %v513 = vpow.pop %v512
    %v514 = vmul.f32 %v454, 1.442695
    %v515 = vpow.pop %v514
    %v516 = vmul.f32 %v455, 1.442695
    %v517 = vpow.pop %v516
    %v518 = vmul.f32 %v456, 1.442695
    %v519 = vpow.pop %v518
    %v520 = vmul.f32 %v457, 1.442695
    %v521 = vpow.pop %v520
    %v522 = vadd.f32 %v459, 1.0
    %v523 = vadd.f32 %v461, 1.0
    %v524 = vadd.f32 %v463, 1.0
    %v525 = vadd.f32 %v465, 1.0
    %v526 = vadd.f32 %v467, 1.0
    %v527 = vadd.f32 %v469, 1.0
    %v528 = vadd.f32 %v471, 1.0
    %v529 = vadd.f32 %v473, 1.0
    %v530 = vadd.f32 %v475, 1.0
    %v531 = vadd.f32 %v477, 1.0
    %v532 = vadd.f32 %v479, 1.0
    %v533 = vadd.f32 %v481, 1.0
    %v534 = vadd.f32 %v483, 1.0
    %v535 = vadd.f32 %v485, 1.0
    %v536 = vadd.f32 %v487, 1.0
    %v537 = vadd.f32 %v489, 1.0
    %v538 = vadd.f32 %v491, 1.0
    %v539 = vadd.f32 %v493, 1.0
    %v540 = vadd.f32 %v495, 1.0
    %v541 = vadd.f32 %v497, 1.0
    %v542 = vadd.f32 %v499, 1.0
    %v543 = vadd.f32 %v501, 1.0
    %v544 = vadd.f32 %v503, 1.0
    %v545 = vadd.f32 %v505, 1.0
    %v546 = vadd.f32 %v507, 1.0
    %v547 = vadd.f32 %v509, 1.0
    %v548 = vadd.f32 %v511, 1.0
    %v549 = vadd.f32 %v513, 1.0
    %v550 = vadd.f32 %v515, 1.0
    %v551 = vadd.f32 %v517, 1.0
    %v552 = vadd.f32 %v519, 1.0
    %v553 = vadd.f32 %v521, 1.0
    %v554 = vrcp.pop %v522
    %v555 = vrcp.pop %v523
    %v556 = vrcp.pop %v524
    %v557 = vrcp.pop %v525
    %v558 = vrcp.pop %v526
    %v559 = vrcp.pop %v527
    %v560 = vrcp.pop %v528
    %v561 = vrcp.pop %v529
    %v562 = vrcp.pop %v530
    %v563 = vrcp.pop %v531
    %v564 = vrcp.pop %v532
    %v565 = vrcp.pop %v533
    %v566 = vrcp.pop %v534
    %v567 = vrcp.pop %v535
    %v568 = vrcp.pop %v536
    %v569 = vrcp.pop %v537
    %v570 = vrcp.pop %v538
    %v571 = vrcp.pop %v539
    %v572 = vrcp.pop %v540
    %v573 = vrcp.pop %v541
    %v574 = vrcp.pop %v542
    %v575 = vrcp.pop %v543
    %v576 = vrcp.pop %v544
    %v577 = vrcp.pop %v545
    %v578 = vrcp.pop %v546
    %v579 = vrcp.pop %v547
    %v580 = vrcp.pop %v548
    %v581 = vrcp.pop %v549
    %v582 = vrcp.pop %v550
    %v583 = vrcp.pop %v551
    %v584 = vrcp.pop %v552
    %v585 = vrcp.pop %v553
    %v586 = vpack.c.bf16 %v556, %v554
    %v587 = vpack.c.bf16 %v557, %v555
    %v588 = vpack.c.bf16 %v560, %v558
    %v589 = vpack.c.bf16 %v561, %v559
    %v590 = vpack.c.bf16 %v564, %v562
    %v591 = vpack.c.bf16 %v565, %v563
    %v592 = vpack.c.bf16 %v568, %v566
    %v593 = vpack.c.bf16 %v569, %v567
    %v594 = vpack.c.bf16 %v572, %v570
    %v595 = vpack.c.bf16 %v573, %v571
    %v596 = vpack.c.bf16 %v576, %v574
    %v597 = vpack.c.bf16 %v577, %v575
    %v598 = vpack.c.bf16 %v580, %v578
    %v599 = vpack.c.bf16 %v581, %v579
    %v600 = vpack.c.bf16 %v584, %v582
    %v601 = vpack.c.bf16 %v585, %v583
    %v602 = vld [vmem:[%s3] sm:$0xf]
    %v603 = vld [vmem:[%s3 + $0x4] sm:$0xf]
    %v604 = vld [vmem:[%s3 + $0x8] sm:$0xf]
    %v605 = vld [vmem:[%s3 + $0xc] sm:$0xf]
    %v606 = vld [vmem:[%s3 + $0x10] sm:$0xf]
    %v607 = vld [vmem:[%s3 + $0x14] sm:$0xf]
    %v608 = vld [vmem:[%s3 + $0x18] sm:$0xf]
    %v609 = vld [vmem:[%s3 + $0x1c] sm:$0xf]
    %v610 = vld [vmem:[%s3 + $0x20] sm:$0xf]
    %v611 = vld [vmem:[%s3 + $0x24] sm:$0xf]
    %v612 = vld [vmem:[%s3 + $0x28] sm:$0xf]
    %v613 = vld [vmem:[%s3 + $0x2c] sm:$0xf]
    %v614 = vld [vmem:[%s3 + $0x30] sm:$0xf]
    %v615 = vld [vmem:[%s3 + $0x34] sm:$0xf]
    %v616 = vld [vmem:[%s3 + $0x38] sm:$0xf]
    %v617 = vld [vmem:[%s3 + $0x3c] sm:$0xf]
    %v618 = vld [vmem:[%s4] sm:$0xff]
    %v619 = vld [vmem:[%s4 + $0x8] sm:$0xff]
    %v620 = vld [vmem:[%s4 + $0x10] sm:$0xff]
    %v621 = vld [vmem:[%s4 + $0x18] sm:$0xff]
    %v622 = vld [vmem:[%s4 + $0x20] sm:$0xff]
    %v623 = vld [vmem:[%s4 + $0x28] sm:$0xff]
    %v624 = vld [vmem:[%s4 + $0x30] sm:$0xff]
    %v625 = vld [vmem:[%s4 + $0x38] sm:$0xff]
    %v626 = vld [vmem:[%s4 + $0x40] sm:$0xff]
    %v627 = vld [vmem:[%s4 + $0x48] sm:$0xff]
    %v628 = vld [vmem:[%s4 + $0x50] sm:$0xff]
    %v629 = vld [vmem:[%s4 + $0x58] sm:$0xff]
    %v630 = vld [vmem:[%s4 + $0x60] sm:$0xff]
    %v631 = vld [vmem:[%s4 + $0x68] sm:$0xff]
    %v632 = vld [vmem:[%s4 + $0x70] sm:$0xff]
    %v633 = vld [vmem:[%s4 + $0x78] sm:$0xff]
    %635 = vset.pattern.permute.xlu0 0
    %636 = vperm.xlu0 %635, %v618
    %v637 = vpop.permute.xlu0 %636
    %640 = vset.pattern.permute.xlu0 0
    %641 = vperm.xlu0 %640, %v619
    %v642 = vpop.permute.xlu0 %641
    %645 = vset.pattern.permute.xlu0 0
    %646 = vperm.xlu0 %645, %v620
    %v647 = vpop.permute.xlu0 %646
    %650 = vset.pattern.permute.xlu0 0
    %651 = vperm.xlu0 %650, %v621
    %v652 = vpop.permute.xlu0 %651
    %655 = vset.pattern.permute.xlu0 0
    %656 = vperm.xlu0 %655, %v622
    %v657 = vpop.permute.xlu0 %656
    %660 = vset.pattern.permute.xlu0 0
    %661 = vperm.xlu0 %660, %v623
    %v662 = vpop.permute.xlu0 %661
    %665 = vset.pattern.permute.xlu0 0
    %666 = vperm.xlu0 %665, %v624
    %v667 = vpop.permute.xlu0 %666
    %670 = vset.pattern.permute.xlu0 0
    %671 = vperm.xlu0 %670, %v625
    %v672 = vpop.permute.xlu0 %671
    %675 = vset.pattern.permute.xlu0 0
    %676 = vperm.xlu0 %675, %v626
    %v677 = vpop.permute.xlu0 %676
    %680 = vset.pattern.permute.xlu0 0
    %681 = vperm.xlu0 %680, %v627
    %v682 = vpop.permute.xlu0 %681
    %685 = vset.pattern.permute.xlu0 0
    %686 = vperm.xlu0 %685, %v628
    %v687 = vpop.permute.xlu0 %686
    %690 = vset.pattern.permute.xlu0 0
    %691 = vperm.xlu0 %690, %v629
    %v692 = vpop.permute.xlu0 %691
    %695 = vset.pattern.permute.xlu0 0
    %696 = vperm.xlu0 %695, %v630
    %v697 = vpop.permute.xlu0 %696
    %700 = vset.pattern.permute.xlu0 0
    %701 = vperm.xlu0 %700, %v631
    %v702 = vpop.permute.xlu0 %701
    %705 = vset.pattern.permute.xlu0 0
    %706 = vperm.xlu0 %705, %v632
    %v707 = vpop.permute.xlu0 %706
    %710 = vset.pattern.permute.xlu0 0
    %711 = vperm.xlu0 %710, %v633
    %v712 = vpop.permute.xlu0 %711
    %v730 = vunpack.c.l.b16 %v602
    %v731 = vunpack.c.l.b16 %v603
    %v732 = vunpack.c.l.b16 %v604
    %v733 = vunpack.c.l.b16 %v605
    %v734 = vunpack.c.l.b16 %v606
    %v735 = vunpack.c.l.b16 %v607
    %v736 = vunpack.c.l.b16 %v608
    %v737 = vunpack.c.l.b16 %v609
    %v738 = vunpack.c.l.b16 %v610
    %v739 = vunpack.c.l.b16 %v611
    %v740 = vunpack.c.l.b16 %v612
    %v741 = vunpack.c.l.b16 %v613
    %v742 = vunpack.c.l.b16 %v614
    %v743 = vunpack.c.l.b16 %v615
    %v744 = vunpack.c.l.b16 %v616
    %v745 = vunpack.c.l.b16 %v617
    %v746 = vpack.c.b16 %v731, %v730
    %v747 = vpack.c.b16 %v733, %v732
    %v748 = vpack.c.b16 %v735, %v734
    %v749 = vpack.c.b16 %v737, %v736
    %v750 = vpack.c.b16 %v739, %v738
    %v751 = vpack.c.b16 %v741, %v740
    %v752 = vpack.c.b16 %v743, %v742
    %v753 = vpack.c.b16 %v745, %v744
    %762 = vmatprep.subr.bf16.mxu0 %v587
    %763 = vmatpush1.bf16.msra.mxu0 %v586
    %764 = vmatprep.subr.bf16.mxu0 %v589
    %765 = vmatpush1.bf16.msra.mxu0 %v588
    %766 = vmatprep.subr.bf16.mxu0 %v591
    %767 = vmatpush1.bf16.msra.mxu0 %v590
    %768 = vmatprep.subr.bf16.mxu0 %v593
    %769 = vmatpush1.bf16.msra.mxu0 %v592
    %770 = vmatprep.subr.bf16.mxu0 %v595
    %771 = vmatpush1.bf16.msra.mxu0 %v594
    %772 = vmatprep.subr.bf16.mxu0 %v597
    %773 = vmatpush1.bf16.msra.mxu0 %v596
    %774 = vmatprep.subr.bf16.mxu0 %v599
    %775 = vmatpush1.bf16.msra.mxu0 %v598
    %776 = vmatprep.subr.bf16.mxu0 %v601
    %777 = vmatpush1.bf16.msra.mxu0 %v600
    %778 = vmatprep.subr.bf16.mxu0 0
    %779 = vmatpush1.bf16.msra.mxu0 0
    %780 = vmatprep.subr.bf16.mxu0 0
    %781 = vmatpush1.bf16.msra.mxu0 0
    %782 = vmatprep.subr.bf16.mxu0 0
    %783 = vmatpush1.bf16.msra.mxu0 0
    %784 = vmatprep.subr.bf16.mxu0 0
    %785 = vmatpush1.bf16.msra.mxu0 0
    %786 = vmatprep.subr.bf16.mxu0 0
    %787 = vmatpush1.bf16.msra.mxu0 0
    %788 = vmatprep.subr.bf16.mxu0 0
    %789 = vmatpush1.bf16.msra.mxu0 0
    %790 = vmatprep.subr.bf16.mxu0 0
    %791 = vmatpush1.bf16.msra.mxu0 0
    %792 = vmatprep.subr.bf16.mxu0 0
    %793 = vmatpush1.bf16.msra.mxu0 0
    %794 = vmatprep.mubr.bf16.mxu0 0
    %795 = vmatmul.mubr.bf16.gmra.mrb[0].mxu0 %v746
    %v796 = vpop.f32.mrb[0].mxu0
    %v797 = vadd.f32 %v637, %v796
    %v798 = vpop.f32.mrb[0].mxu0
    %v799 = vadd.f32 %v637, %v798
    %v800 = vpop.f32.mrb[0].mxu0
    %v801 = vadd.f32 %v642, %v800
    %v802 = vpop.f32.mrb[0].mxu0
    %v803 = vadd.f32 %v642, %v802
    %804 = vmatprep.mubr.bf16.mxu0 0
    %805 = vmatmul.mubr.bf16.gmra.mrb[0].mxu0 %v747
    %v806 = vpop.f32.mrb[0].mxu0
    %v807 = vadd.f32 %v647, %v806
    %v808 = vpop.f32.mrb[0].mxu0
    %v809 = vadd.f32 %v647, %v808
    %v810 = vpop.f32.mrb[0].mxu0
    %v811 = vadd.f32 %v652, %v810
    %v812 = vpop.f32.mrb[0].mxu0
    %v813 = vadd.f32 %v652, %v812
    %814 = vmatprep.mubr.bf16.mxu0 0
    %815 = vmatmul.mubr.bf16.gmra.mrb[0].mxu0 %v748
    %v816 = vpop.f32.mrb[0].mxu0
    %v817 = vadd.f32 %v657, %v816
    %v818 = vpop.f32.mrb[0].mxu0
    %v819 = vadd.f32 %v657, %v818
    %v820 = vpop.f32.mrb[0].mxu0
    %v821 = vadd.f32 %v662, %v820
    %v822 = vpop.f32.mrb[0].mxu0
    %v823 = vadd.f32 %v662, %v822
    %824 = vmatprep.mubr.bf16.mxu0 0
    %825 = vmatmul.mubr.bf16.gmra.mrb[0].mxu0 %v749
    %v826 = vpop.f32.mrb[0].mxu0
    %v827 = vadd.f32 %v667, %v826
    %v828 = vpop.f32.mrb[0].mxu0
    %v829 = vadd.f32 %v667, %v828
    %v830 = vpop.f32.mrb[0].mxu0
    %v831 = vadd.f32 %v672, %v830
    %v832 = vpop.f32.mrb[0].mxu0
    %v833 = vadd.f32 %v672, %v832
    %834 = vmatprep.mubr.bf16.mxu0 0
    %835 = vmatmul.mubr.bf16.gmra.mrb[0].mxu0 %v750
    %v836 = vpop.f32.mrb[0].mxu0
    %v837 = vadd.f32 %v677, %v836
    %v838 = vpop.f32.mrb[0].mxu0
    %v839 = vadd.f32 %v677, %v838
    %v840 = vpop.f32.mrb[0].mxu0
    %v841 = vadd.f32 %v682, %v840
    %v842 = vpop.f32.mrb[0].mxu0
    %v843 = vadd.f32 %v682, %v842
    %844 = vmatprep.mubr.bf16.mxu0 0
    %845 = vmatmul.mubr.bf16.gmra.mrb[0].mxu0 %v751
    %v846 = vpop.f32.mrb[0].mxu0
    %v847 = vadd.f32 %v687, %v846
    %v848 = vpop.f32.mrb[0].mxu0
    %v849 = vadd.f32 %v687, %v848
    %v850 = vpop.f32.mrb[0].mxu0
    %v851 = vadd.f32 %v692, %v850
    %v852 = vpop.f32.mrb[0].mxu0
    %v853 = vadd.f32 %v692, %v852
    %854 = vmatprep.mubr.bf16.mxu0 0
    %855 = vmatmul.mubr.bf16.gmra.mrb[0].mxu0 %v752
    %v856 = vpop.f32.mrb[0].mxu0
    %v857 = vadd.f32 %v697, %v856
    %v858 = vpop.f32.mrb[0].mxu0
    %v859 = vadd.f32 %v697, %v858
    %v860 = vpop.f32.mrb[0].mxu0
    %v861 = vadd.f32 %v702, %v860
    %v862 = vpop.f32.mrb[0].mxu0
    %v863 = vadd.f32 %v702, %v862
    %864 = vmatprep.mubr.bf16.mxu0 0
    %865 = vmatmul.mubr.bf16.gmra.mrb[0].mxu0 %v753
    %v866 = vpop.f32.mrb[0].mxu0
    %v867 = vadd.f32 %v707, %v866
    %v868 = vpop.f32.mrb[0].mxu0
    %v869 = vadd.f32 %v707, %v868
    %v870 = vpop.f32.mrb[0].mxu0
    %v871 = vadd.f32 %v712, %v870
    %v872 = vpop.f32.mrb[0].mxu0
    %v873 = vadd.f32 %v712, %v872
    %874 = vdwg.mxu0
    %v875 = vsub.f32 0.0, %v797
    %v876 = vsub.f32 0.0, %v799
    %v877 = vsub.f32 0.0, %v801
    %v878 = vsub.f32 0.0, %v803
    %v879 = vsub.f32 0.0, %v807
    %v880 = vsub.f32 0.0, %v809
    %v881 = vsub.f32 0.0, %v811
    %v882 = vsub.f32 0.0, %v813
    %v883 = vsub.f32 0.0, %v817
    %v884 = vsub.f32 0.0, %v819
    %v885 = vsub.f32 0.0, %v821
    %v886 = vsub.f32 0.0, %v823
    %v887 = vsub.f32 0.0, %v827
    %v888 = vsub.f32 0.0, %v829
    %v889 = vsub.f32 0.0, %v831
    %v890 = vsub.f32 0.0, %v833
    %v891 = vsub.f32 0.0, %v837
    %v892 = vsub.f32 0.0, %v839
    %v893 = vsub.f32 0.0, %v841
    %v894 = vsub.f32 0.0, %v843
    %v895 = vsub.f32 0.0, %v847
    %v896 = vsub.f32 0.0, %v849
    %v897 = vsub.f32 0.0, %v851
    %v898 = vsub.f32 0.0, %v853
    %v899 = vsub.f32 0.0, %v857
    %v900 = vsub.f32 0.0, %v859
    %v901 = vsub.f32 0.0, %v861
    %v902 = vsub.f32 0.0, %v863
    %v903 = vsub.f32 0.0, %v867
    %v904 = vsub.f32 0.0, %v869
    %v905 = vsub.f32 0.0, %v871
    %v906 = vsub.f32 0.0, %v873
    %v907 = vmul.f32 %v875, 1.442695
    %v908 = vpow.pop %v907
    %v909 = vmul.f32 %v876, 1.442695
    %v910 = vpow.pop %v909
    %v911 = vmul.f32 %v877, 1.442695
    %v912 = vpow.pop %v911
    %v913 = vmul.f32 %v878, 1.442695
    %v914 = vpow.pop %v913
    %v915 = vmul.f32 %v879, 1.442695
    %v916 = vpow.pop %v915
    %v917 = vmul.f32 %v880, 1.442695
    %v918 = vpow.pop %v917
    %v919 = vmul.f32 %v881, 1.442695
    %v920 = vpow.pop %v919
    %v921 = vmul.f32 %v882, 1.442695
    %v922 = vpow.pop %v921
    %v923 = vmul.f32 %v883, 1.442695
    %v924 = vpow.pop %v923
    %v925 = vmul.f32 %v884, 1.442695
    %v926 = vpow.pop %v925
    %v927 = vmul.f32 %v885, 1.442695
    %v928 = vpow.pop %v927
    %v929 = vmul.f32 %v886, 1.442695
    %v930 = vpow.pop %v929
    %v931 = vmul.f32 %v887, 1.442695
    %v932 = vpow.pop %v931
    %v933 = vmul.f32 %v888, 1.442695
    %v934 = vpow.pop %v933
    %v935 = vmul.f32 %v889, 1.442695
    %v936 = vpow.pop %v935
    %v937 = vmul.f32 %v890, 1.442695
    %v938 = vpow.pop %v937
    %v939 = vmul.f32 %v891, 1.442695
    %v940 = vpow.pop %v939
    %v941 = vmul.f32 %v892, 1.442695
    %v942 = vpow.pop %v941
    %v943 = vmul.f32 %v893, 1.442695
    %v944 = vpow.pop %v943
    %v945 = vmul.f32 %v894, 1.442695
    %v946 = vpow.pop %v945
    %v947 = vmul.f32 %v895, 1.442695
    %v948 = vpow.pop %v947
    %v949 = vmul.f32 %v896, 1.442695
    %v950 = vpow.pop %v949
    %v951 = vmul.f32 %v897, 1.442695
    %v952 = vpow.pop %v951
    %v953 = vmul.f32 %v898, 1.442695
    %v954 = vpow.pop %v953
    %v955 = vmul.f32 %v899, 1.442695
    %v956 = vpow.pop %v955
    %v957 = vmul.f32 %v900, 1.442695
    %v958 = vpow.pop %v957
    %v959 = vmul.f32 %v901, 1.442695
    %v960 = vpow.pop %v959
    %v961 = vmul.f32 %v902, 1.442695
    %v962 = vpow.pop %v961
    %v963 = vmul.f32 %v903, 1.442695
    %v964 = vpow.pop %v963
    %v965 = vmul.f32 %v904, 1.442695
    %v966 = vpow.pop %v965
    %v967 = vmul.f32 %v905, 1.442695
    %v968 = vpow.pop %v967
    %v969 = vmul.f32 %v906, 1.442695
    %v970 = vpow.pop %v969
    %v971 = vadd.f32 %v908, 1.0
    %v972 = vadd.f32 %v910, 1.0
    %v973 = vadd.f32 %v912, 1.0
    %v974 = vadd.f32 %v914, 1.0
    %v975 = vadd.f32 %v916, 1.0
    %v976 = vadd.f32 %v918, 1.0
    %v977 = vadd.f32 %v920, 1.0
    %v978 = vadd.f32 %v922, 1.0
    %v979 = vadd.f32 %v924, 1.0
    %v980 = vadd.f32 %v926, 1.0
    %v981 = vadd.f32 %v928, 1.0
    %v982 = vadd.f32 %v930, 1.0
    %v983 = vadd.f32 %v932, 1.0
    %v984 = vadd.f32 %v934, 1.0
    %v985 = vadd.f32 %v936, 1.0
    %v986 = vadd.f32 %v938, 1.0
    %v987 = vadd.f32 %v940, 1.0
    %v988 = vadd.f32 %v942, 1.0
    %v989 = vadd.f32 %v944, 1.0
    %v990 = vadd.f32 %v946, 1.0
    %v991 = vadd.f32 %v948, 1.0
    %v992 = vadd.f32 %v950, 1.0
    %v993 = vadd.f32 %v952, 1.0
    %v994 = vadd.f32 %v954, 1.0
    %v995 = vadd.f32 %v956, 1.0
    %v996 = vadd.f32 %v958, 1.0
    %v997 = vadd.f32 %v960, 1.0
    %v998 = vadd.f32 %v962, 1.0
    %v999 = vadd.f32 %v964, 1.0
    %v1000 = vadd.f32 %v966, 1.0
    %v1001 = vadd.f32 %v968, 1.0
    %v1002 = vadd.f32 %v970, 1.0
    %v1003 = vrcp.pop %v971
    %v1004 = vrcp.pop %v972
    %v1005 = vrcp.pop %v973
    %v1006 = vrcp.pop %v974
    %v1007 = vrcp.pop %v975
    %v1008 = vrcp.pop %v976
    %v1009 = vrcp.pop %v977
    %v1010 = vrcp.pop %v978
    %v1011 = vrcp.pop %v979
    %v1012 = vrcp.pop %v980
    %v1013 = vrcp.pop %v981
    %v1014 = vrcp.pop %v982
    %v1015 = vrcp.pop %v983
    %v1016 = vrcp.pop %v984
    %v1017 = vrcp.pop %v985
    %v1018 = vrcp.pop %v986
    %v1019 = vrcp.pop %v987
    %v1020 = vrcp.pop %v988
    %v1021 = vrcp.pop %v989
    %v1022 = vrcp.pop %v990
    %v1023 = vrcp.pop %v991
    %v1024 = vrcp.pop %v992
    %v1025 = vrcp.pop %v993
    %v1026 = vrcp.pop %v994
    %v1027 = vrcp.pop %v995
    %v1028 = vrcp.pop %v996
    %v1029 = vrcp.pop %v997
    %v1030 = vrcp.pop %v998
    %v1031 = vrcp.pop %v999
    %v1032 = vrcp.pop %v1000
    %v1033 = vrcp.pop %v1001
    %v1034 = vrcp.pop %v1002
    %v1035 = vpack.c.bf16 %v1005, %v1003
    %v1036 = vpack.c.bf16 %v1006, %v1004
    %v1037 = vpack.c.bf16 %v1009, %v1007
    %v1038 = vpack.c.bf16 %v1010, %v1008
    %v1039 = vpack.c.bf16 %v1013, %v1011
    %v1040 = vpack.c.bf16 %v1014, %v1012
    %v1041 = vpack.c.bf16 %v1017, %v1015
    %v1042 = vpack.c.bf16 %v1018, %v1016
    %v1043 = vpack.c.bf16 %v1021, %v1019
    %v1044 = vpack.c.bf16 %v1022, %v1020
    %v1045 = vpack.c.bf16 %v1025, %v1023
    %v1046 = vpack.c.bf16 %v1026, %v1024
    %v1047 = vpack.c.bf16 %v1029, %v1027
    %v1048 = vpack.c.bf16 %v1030, %v1028
    %v1049 = vpack.c.bf16 %v1033, %v1031
    %v1050 = vpack.c.bf16 %v1034, %v1032
    %s1051 = scalar_lea.vmem %s3, 64
    %v1052 = vld [vmem:[%s1051] sm:$0xf]
    %v1053 = vld [vmem:[%s1051 + $0x4] sm:$0xf]
    %v1054 = vld [vmem:[%s1051 + $0x8] sm:$0xf]
    %v1055 = vld [vmem:[%s1051 + $0xc] sm:$0xf]
    %v1056 = vld [vmem:[%s1051 + $0x10] sm:$0xf]
    %v1057 = vld [vmem:[%s1051 + $0x14] sm:$0xf]
    %v1058 = vld [vmem:[%s1051 + $0x18] sm:$0xf]
    %v1059 = vld [vmem:[%s1051 + $0x1c] sm:$0xf]
    %v1060 = vld [vmem:[%s1051 + $0x20] sm:$0xf]
    %v1061 = vld [vmem:[%s1051 + $0x24] sm:$0xf]
    %v1062 = vld [vmem:[%s1051 + $0x28] sm:$0xf]
    %v1063 = vld [vmem:[%s1051 + $0x2c] sm:$0xf]
    %v1064 = vld [vmem:[%s1051 + $0x30] sm:$0xf]
    %v1065 = vld [vmem:[%s1051 + $0x34] sm:$0xf]
    %v1066 = vld [vmem:[%s1051 + $0x38] sm:$0xf]
    %v1067 = vld [vmem:[%s1051 + $0x3c] sm:$0xf]
    %s1068 = scalar_lea.vmem %s4, 128
    %v1069 = vld [vmem:[%s1068] sm:$0xff]
    %v1070 = vld [vmem:[%s1068 + $0x8] sm:$0xff]
    %v1071 = vld [vmem:[%s1068 + $0x10] sm:$0xff]
    %v1072 = vld [vmem:[%s1068 + $0x18] sm:$0xff]
    %v1073 = vld [vmem:[%s1068 + $0x20] sm:$0xff]
    %v1074 = vld [vmem:[%s1068 + $0x28] sm:$0xff]
    %v1075 = vld [vmem:[%s1068 + $0x30] sm:$0xff]
    %v1076 = vld [vmem:[%s1068 + $0x38] sm:$0xff]
    %v1077 = vld [vmem:[%s1068 + $0x40] sm:$0xff]
    %v1078 = vld [vmem:[%s1068 + $0x48] sm:$0xff]
    %v1079 = vld [vmem:[%s1068 + $0x50] sm:$0xff]
    %v1080 = vld [vmem:[%s1068 + $0x58] sm:$0xff]
    %v1081 = vld [vmem:[%s1068 + $0x60] sm:$0xff]
    %v1082 = vld [vmem:[%s1068 + $0x68] sm:$0xff]
    %v1083 = vld [vmem:[%s1068 + $0x70] sm:$0xff]
    %v1084 = vld [vmem:[%s1068 + $0x78] sm:$0xff]
    %1086 = vset.pattern.permute.xlu0 0
    %1087 = vperm.xlu0 %1086, %v1069
    %v1088 = vpop.permute.xlu0 %1087
    %1091 = vset.pattern.permute.xlu0 0
    %1092 = vperm.xlu0 %1091, %v1070
    %v1093 = vpop.permute.xlu0 %1092
    %1096 = vset.pattern.permute.xlu0 0
    %1097 = vperm.xlu0 %1096, %v1071
    %v1098 = vpop.permute.xlu0 %1097
    %1101 = vset.pattern.permute.xlu0 0
    %1102 = vperm.xlu0 %1101, %v1072
    %v1103 = vpop.permute.xlu0 %1102
    %1106 = vset.pattern.permute.xlu0 0
    %1107 = vperm.xlu0 %1106, %v1073
    %v1108 = vpop.permute.xlu0 %1107
    %1111 = vset.pattern.permute.xlu0 0
    %1112 = vperm.xlu0 %1111, %v1074
    %v1113 = vpop.permute.xlu0 %1112
    %1116 = vset.pattern.permute.xlu0 0
    %1117 = vperm.xlu0 %1116, %v1075
    %v1118 = vpop.permute.xlu0 %1117
    %1121 = vset.pattern.permute.xlu0 0
    %1122 = vperm.xlu0 %1121, %v1076
    %v1123 = vpop.permute.xlu0 %1122
    %1126 = vset.pattern.permute.xlu0 0
    %1127 = vperm.xlu0 %1126, %v1077
    %v1128 = vpop.permute.xlu0 %1127
    %1131 = vset.pattern.permute.xlu0 0
    %1132 = vperm.xlu0 %1131, %v1078
    %v1133 = vpop.permute.xlu0 %1132
    %1136 = vset.pattern.permute.xlu0 0
    %1137 = vperm.xlu0 %1136, %v1079
    %v1138 = vpop.permute.xlu0 %1137
    %1141 = vset.pattern.permute.xlu0 0
    %1142 = vperm.xlu0 %1141, %v1080
    %v1143 = vpop.permute.xlu0 %1142
    %1146 = vset.pattern.permute.xlu0 0
    %1147 = vperm.xlu0 %1146, %v1081
    %v1148 = vpop.permute.xlu0 %1147
    %1151 = vset.pattern.permute.xlu0 0
    %1152 = vperm.xlu0 %1151, %v1082
    %v1153 = vpop.permute.xlu0 %1152
    %1156 = vset.pattern.permute.xlu0 0
    %1157 = vperm.xlu0 %1156, %v1083
    %v1158 = vpop.permute.xlu0 %1157
    %1161 = vset.pattern.permute.xlu0 0
    %1162 = vperm.xlu0 %1161, %v1084
    %v1163 = vpop.permute.xlu0 %1162
    %v1181 = vunpack.c.l.b16 %v1052
    %v1182 = vunpack.c.l.b16 %v1053
    %v1183 = vunpack.c.l.b16 %v1054
    %v1184 = vunpack.c.l.b16 %v1055
    %v1185 = vunpack.c.l.b16 %v1056
    %v1186 = vunpack.c.l.b16 %v1057
    %v1187 = vunpack.c.l.b16 %v1058
    %v1188 = vunpack.c.l.b16 %v1059
    %v1189 = vunpack.c.l.b16 %v1060
    %v1190 = vunpack.c.l.b16 %v1061
    %v1191 = vunpack.c.l.b16 %v1062
    %v1192 = vunpack.c.l.b16 %v1063
    %v1193 = vunpack.c.l.b16 %v1064
    %v1194 = vunpack.c.l.b16 %v1065
    %v1195 = vunpack.c.l.b16 %v1066
    %v1196 = vunpack.c.l.b16 %v1067
    %v1197 = vpack.c.b16 %v1182, %v1181
    %v1198 = vpack.c.b16 %v1184, %v1183
    %v1199 = vpack.c.b16 %v1186, %v1185
    %v1200 = vpack.c.b16 %v1188, %v1187
    %v1201 = vpack.c.b16 %v1190, %v1189
    %v1202 = vpack.c.b16 %v1192, %v1191
    %v1203 = vpack.c.b16 %v1194, %v1193
    %v1204 = vpack.c.b16 %v1196, %v1195
    %1213 = vmatprep.subr.bf16.mxu0 %v1036
    %1214 = vmatpush1.bf16.msra.mxu0 %v1035
    %1215 = vmatprep.subr.bf16.mxu0 %v1038
    %1216 = vmatpush1.bf16.msra.mxu0 %v1037
    %1217 = vmatprep.subr.bf16.mxu0 %v1040
    %1218 = vmatpush1.bf16.msra.mxu0 %v1039
    %1219 = vmatprep.subr.bf16.mxu0 %v1042
    %1220 = vmatpush1.bf16.msra.mxu0 %v1041
    %1221 = vmatprep.subr.bf16.mxu0 %v1044
    %1222 = vmatpush1.bf16.msra.mxu0 %v1043
    %1223 = vmatprep.subr.bf16.mxu0 %v1046
    %1224 = vmatpush1.bf16.msra.mxu0 %v1045
    %1225 = vmatprep.subr.bf16.mxu0 %v1048
    %1226 = vmatpush1.bf16.msra.mxu0 %v1047
    %1227 = vmatprep.subr.bf16.mxu0 %v1050
    %1228 = vmatpush1.bf16.msra.mxu0 %v1049
    %1229 = vmatprep.subr.bf16.mxu0 0
    %1230 = vmatpush1.bf16.msra.mxu0 0
    %1231 = vmatprep.subr.bf16.mxu0 0
    %1232 = vmatpush1.bf16.msra.mxu0 0
    %1233 = vmatprep.subr.bf16.mxu0 0
    %1234 = vmatpush1.bf16.msra.mxu0 0
    %1235 = vmatprep.subr.bf16.mxu0 0
    %1236 = vmatpush1.bf16.msra.mxu0 0
    %1237 = vmatprep.subr.bf16.mxu0 0
    %1238 = vmatpush1.bf16.msra.mxu0 0
    %1239 = vmatprep.subr.bf16.mxu0 0
    %1240 = vmatpush1.bf16.msra.mxu0 0
    %1241 = vmatprep.subr.bf16.mxu0 0
    %1242 = vmatpush1.bf16.msra.mxu0 0
    %1243 = vmatprep.subr.bf16.mxu0 0
    %1244 = vmatpush1.bf16.msra.mxu0 0
    %1245 = vmatprep.mubr.bf16.mxu0 0
    %1246 = vmatmul.mubr.bf16.gmra.mrb[0].mxu0 %v1197
    %v1247 = vpop.f32.mrb[0].mxu0
    %v1248 = vadd.f32 %v1088, %v1247
    %v1249 = vpop.f32.mrb[0].mxu0
    %v1250 = vadd.f32 %v1088, %v1249
    %v1251 = vpop.f32.mrb[0].mxu0
    %v1252 = vadd.f32 %v1093, %v1251
    %v1253 = vpop.f32.mrb[0].mxu0
    %v1254 = vadd.f32 %v1093, %v1253
    %1255 = vmatprep.mubr.bf16.mxu0 0
    %1256 = vmatmul.mubr.bf16.gmra.mrb[0].mxu0 %v1198
    %v1257 = vpop.f32.mrb[0].mxu0
    %v1258 = vadd.f32 %v1098, %v1257
    %v1259 = vpop.f32.mrb[0].mxu0
    %v1260 = vadd.f32 %v1098, %v1259
    %v1261 = vpop.f32.mrb[0].mxu0
    %v1262 = vadd.f32 %v1103, %v1261
    %v1263 = vpop.f32.mrb[0].mxu0
    %v1264 = vadd.f32 %v1103, %v1263
    %1265 = vmatprep.mubr.bf16.mxu0 0
    %1266 = vmatmul.mubr.bf16.gmra.mrb[0].mxu0 %v1199
    %v1267 = vpop.f32.mrb[0].mxu0
    %v1268 = vadd.f32 %v1108, %v1267
    %v1269 = vpop.f32.mrb[0].mxu0
    %v1270 = vadd.f32 %v1108, %v1269
    %v1271 = vpop.f32.mrb[0].mxu0
    %v1272 = vadd.f32 %v1113, %v1271
    %v1273 = vpop.f32.mrb[0].mxu0
    %v1274 = vadd.f32 %v1113, %v1273
    %1275 = vmatprep.mubr.bf16.mxu0 0
    %1276 = vmatmul.mubr.bf16.gmra.mrb[0].mxu0 %v1200
    %v1277 = vpop.f32.mrb[0].mxu0
    %v1278 = vadd.f32 %v1118, %v1277
    %v1279 = vpop.f32.mrb[0].mxu0
    %v1280 = vadd.f32 %v1118, %v1279
    %v1281 = vpop.f32.mrb[0].mxu0
    %v1282 = vadd.f32 %v1123, %v1281
    %v1283 = vpop.f32.mrb[0].mxu0
    %v1284 = vadd.f32 %v1123, %v1283
    %1285 = vmatprep.mubr.bf16.mxu0 0
    %1286 = vmatmul.mubr.bf16.gmra.mrb[0].mxu0 %v1201
    %v1287 = vpop.f32.mrb[0].mxu0
    %v1288 = vadd.f32 %v1128, %v1287
    %v1289 = vpop.f32.mrb[0].mxu0
    %v1290 = vadd.f32 %v1128, %v1289
    %v1291 = vpop.f32.mrb[0].mxu0
    %v1292 = vadd.f32 %v1133, %v1291
    %v1293 = vpop.f32.mrb[0].mxu0
    %v1294 = vadd.f32 %v1133, %v1293
    %1295 = vmatprep.mubr.bf16.mxu0 0
    %1296 = vmatmul.mubr.bf16.gmra.mrb[0].mxu0 %v1202
    %v1297 = vpop.f32.mrb[0].mxu0
    %v1298 = vadd.f32 %v1138, %v1297
    %v1299 = vpop.f32.mrb[0].mxu0
    %v1300 = vadd.f32 %v1138, %v1299
    %v1301 = vpop.f32.mrb[0].mxu0
    %v1302 = vadd.f32 %v1143, %v1301
    %v1303 = vpop.f32.mrb[0].mxu0
    %v1304 = vadd.f32 %v1143, %v1303
    %1305 = vmatprep.mubr.bf16.mxu0 0
    %1306 = vmatmul.mubr.bf16.gmra.mrb[0].mxu0 %v1203
    %v1307 = vpop.f32.mrb[0].mxu0
    %v1308 = vadd.f32 %v1148, %v1307
    %v1309 = vpop.f32.mrb[0].mxu0
    %v1310 = vadd.f32 %v1148, %v1309
    %v1311 = vpop.f32.mrb[0].mxu0
    %v1312 = vadd.f32 %v1153, %v1311
    %v1313 = vpop.f32.mrb[0].mxu0
    %v1314 = vadd.f32 %v1153, %v1313
    %1315 = vmatprep.mubr.bf16.mxu0 0
    %1316 = vmatmul.mubr.bf16.gmra.mrb[0].mxu0 %v1204
    %v1317 = vpop.f32.mrb[0].mxu0
    %v1318 = vadd.f32 %v1158, %v1317
    %v1319 = vpop.f32.mrb[0].mxu0
    %v1320 = vadd.f32 %v1158, %v1319
    %v1321 = vpop.f32.mrb[0].mxu0
    %v1322 = vadd.f32 %v1163, %v1321
    %v1323 = vpop.f32.mrb[0].mxu0
    %v1324 = vadd.f32 %v1163, %v1323
    %1325 = vdwg.mxu0
    %v1326 = vsub.f32 0.0, %v1248
    %v1327 = vsub.f32 0.0, %v1250
    %v1328 = vsub.f32 0.0, %v1252
    %v1329 = vsub.f32 0.0, %v1254
    %v1330 = vsub.f32 0.0, %v1258
    %v1331 = vsub.f32 0.0, %v1260
    %v1332 = vsub.f32 0.0, %v1262
    %v1333 = vsub.f32 0.0, %v1264
    %v1334 = vsub.f32 0.0, %v1268
    %v1335 = vsub.f32 0.0, %v1270
    %v1336 = vsub.f32 0.0, %v1272
    %v1337 = vsub.f32 0.0, %v1274
    %v1338 = vsub.f32 0.0, %v1278
    %v1339 = vsub.f32 0.0, %v1280
    %v1340 = vsub.f32 0.0, %v1282
    %v1341 = vsub.f32 0.0, %v1284
    %v1342 = vsub.f32 0.0, %v1288
    %v1343 = vsub.f32 0.0, %v1290
    %v1344 = vsub.f32 0.0, %v1292
    %v1345 = vsub.f32 0.0, %v1294
    %v1346 = vsub.f32 0.0, %v1298
    %v1347 = vsub.f32 0.0, %v1300
    %v1348 = vsub.f32 0.0, %v1302
    %v1349 = vsub.f32 0.0, %v1304
    %v1350 = vsub.f32 0.0, %v1308
    %v1351 = vsub.f32 0.0, %v1310
    %v1352 = vsub.f32 0.0, %v1312
    %v1353 = vsub.f32 0.0, %v1314
    %v1354 = vsub.f32 0.0, %v1318
    %v1355 = vsub.f32 0.0, %v1320
    %v1356 = vsub.f32 0.0, %v1322
    %v1357 = vsub.f32 0.0, %v1324
    %v1358 = vmul.f32 %v1326, 1.442695
    %v1359 = vpow.pop %v1358
    %v1360 = vmul.f32 %v1327, 1.442695
    %v1361 = vpow.pop %v1360
    %v1362 = vmul.f32 %v1328, 1.442695
    %v1363 = vpow.pop %v1362
    %v1364 = vmul.f32 %v1329, 1.442695
    %v1365 = vpow.pop %v1364
    %v1366 = vmul.f32 %v1330, 1.442695
    %v1367 = vpow.pop %v1366
    %v1368 = vmul.f32 %v1331, 1.442695
    %v1369 = vpow.pop %v1368
    %v1370 = vmul.f32 %v1332, 1.442695
    %v1371 = vpow.pop %v1370
    %v1372 = vmul.f32 %v1333, 1.442695
    %v1373 = vpow.pop %v1372
    %v1374 = vmul.f32 %v1334, 1.442695
    %v1375 = vpow.pop %v1374
    %v1376 = vmul.f32 %v1335, 1.442695
    %v1377 = vpow.pop %v1376
    %v1378 = vmul.f32 %v1336, 1.442695
    %v1379 = vpow.pop %v1378
    %v1380 = vmul.f32 %v1337, 1.442695
    %v1381 = vpow.pop %v1380
    %v1382 = vmul.f32 %v1338, 1.442695
    %v1383 = vpow.pop %v1382
    %v1384 = vmul.f32 %v1339, 1.442695
    %v1385 = vpow.pop %v1384
    %v1386 = vmul.f32 %v1340, 1.442695
    %v1387 = vpow.pop %v1386
    %v1388 = vmul.f32 %v1341, 1.442695
    %v1389 = vpow.pop %v1388
    %v1390 = vmul.f32 %v1342, 1.442695
    %v1391 = vpow.pop %v1390
    %v1392 = vmul.f32 %v1343, 1.442695
    %v1393 = vpow.pop %v1392
    %v1394 = vmul.f32 %v1344, 1.442695
    %v1395 = vpow.pop %v1394
    %v1396 = vmul.f32 %v1345, 1.442695
    %v1397 = vpow.pop %v1396
    %v1398 = vmul.f32 %v1346, 1.442695
    %v1399 = vpow.pop %v1398
    %v1400 = vmul.f32 %v1347, 1.442695
    %v1401 = vpow.pop %v1400
    %v1402 = vmul.f32 %v1348, 1.442695
    %v1403 = vpow.pop %v1402
    %v1404 = vmul.f32 %v1349, 1.442695
    %v1405 = vpow.pop %v1404
    %v1406 = vmul.f32 %v1350, 1.442695
    %v1407 = vpow.pop %v1406
    %v1408 = vmul.f32 %v1351, 1.442695
    %v1409 = vpow.pop %v1408
    %v1410 = vmul.f32 %v1352, 1.442695
    %v1411 = vpow.pop %v1410
    %v1412 = vmul.f32 %v1353, 1.442695
    %v1413 = vpow.pop %v1412
    %v1414 = vmul.f32 %v1354, 1.442695
    %v1415 = vpow.pop %v1414
    %v1416 = vmul.f32 %v1355, 1.442695
    %v1417 = vpow.pop %v1416
    %v1418 = vmul.f32 %v1356, 1.442695
    %v1419 = vpow.pop %v1418
    %v1420 = vmul.f32 %v1357, 1.442695
    %v1421 = vpow.pop %v1420
    %v1422 = vadd.f32 %v1359, 1.0
    %v1423 = vadd.f32 %v1361, 1.0
    %v1424 = vadd.f32 %v1363, 1.0
    %v1425 = vadd.f32 %v1365, 1.0
    %v1426 = vadd.f32 %v1367, 1.0
    %v1427 = vadd.f32 %v1369, 1.0
    %v1428 = vadd.f32 %v1371, 1.0
    %v1429 = vadd.f32 %v1373, 1.0
    %v1430 = vadd.f32 %v1375, 1.0
    %v1431 = vadd.f32 %v1377, 1.0
    %v1432 = vadd.f32 %v1379, 1.0
    %v1433 = vadd.f32 %v1381, 1.0
    %v1434 = vadd.f32 %v1383, 1.0
    %v1435 = vadd.f32 %v1385, 1.0
    %v1436 = vadd.f32 %v1387, 1.0
    %v1437 = vadd.f32 %v1389, 1.0
    %v1438 = vadd.f32 %v1391, 1.0
    %v1439 = vadd.f32 %v1393, 1.0
    %v1440 = vadd.f32 %v1395, 1.0
    %v1441 = vadd.f32 %v1397, 1.0
    %v1442 = vadd.f32 %v1399, 1.0
    %v1443 = vadd.f32 %v1401, 1.0
    %v1444 = vadd.f32 %v1403, 1.0
    %v1445 = vadd.f32 %v1405, 1.0
    %v1446 = vadd.f32 %v1407, 1.0
    %v1447 = vadd.f32 %v1409, 1.0
    %v1448 = vadd.f32 %v1411, 1.0
    %v1449 = vadd.f32 %v1413, 1.0
    %v1450 = vadd.f32 %v1415, 1.0
    %v1451 = vadd.f32 %v1417, 1.0
    %v1452 = vadd.f32 %v1419, 1.0
    %v1453 = vadd.f32 %v1421, 1.0
    %v1454 = vrcp.pop %v1422
    %v1455 = vrcp.pop %v1423
    %v1456 = vrcp.pop %v1424
    %v1457 = vrcp.pop %v1425
    %v1458 = vrcp.pop %v1426
    %v1459 = vrcp.pop %v1427
    %v1460 = vrcp.pop %v1428
    %v1461 = vrcp.pop %v1429
    %v1462 = vrcp.pop %v1430
    %v1463 = vrcp.pop %v1431
    %v1464 = vrcp.pop %v1432
    %v1465 = vrcp.pop %v1433
    %v1466 = vrcp.pop %v1434
    %v1467 = vrcp.pop %v1435
    %v1468 = vrcp.pop %v1436
    %v1469 = vrcp.pop %v1437
    %v1470 = vrcp.pop %v1438
    %v1471 = vrcp.pop %v1439
    %v1472 = vrcp.pop %v1440
    %v1473 = vrcp.pop %v1441
    %v1474 = vrcp.pop %v1442
    %v1475 = vrcp.pop %v1443
    %v1476 = vrcp.pop %v1444
    %v1477 = vrcp.pop %v1445
    %v1478 = vrcp.pop %v1446
    %v1479 = vrcp.pop %v1447
    %v1480 = vrcp.pop %v1448
    %v1481 = vrcp.pop %v1449
    %v1482 = vrcp.pop %v1450
    %v1483 = vrcp.pop %v1451
    %v1484 = vrcp.pop %v1452
    %v1485 = vrcp.pop %v1453
    %v1486 = vpack.c.bf16 %v1456, %v1454
    %v1487 = vpack.c.bf16 %v1457, %v1455
    %v1488 = vpack.c.bf16 %v1460, %v1458
    %v1489 = vpack.c.bf16 %v1461, %v1459
    %v1490 = vpack.c.bf16 %v1464, %v1462
    %v1491 = vpack.c.bf16 %v1465, %v1463
    %v1492 = vpack.c.bf16 %v1468, %v1466
    %v1493 = vpack.c.bf16 %v1469, %v1467
    %v1494 = vpack.c.bf16 %v1472, %v1470
    %v1495 = vpack.c.bf16 %v1473, %v1471
    %v1496 = vpack.c.bf16 %v1476, %v1474
    %v1497 = vpack.c.bf16 %v1477, %v1475
    %v1498 = vpack.c.bf16 %v1480, %v1478
    %v1499 = vpack.c.bf16 %v1481, %v1479
    %v1500 = vpack.c.bf16 %v1484, %v1482
    %v1501 = vpack.c.bf16 %v1485, %v1483
    %v1502 = vld [vmem:[%s5] sm:$0xf]
    %v1503 = vld [vmem:[%s5 + $0x4] sm:$0xf]
    %v1506 = vunpack.c.l.b16 %v1502
    %v1507 = vunpack.c.l.b16 %v1503
    %v1508 = vpack.c.b16 %v1507, %v1506
    %1510 = vmatprep.subr.bf16.mxu0 %v1487
    %1511 = vmatpush1.bf16.msra.mxu0 %v1486
    %1512 = vmatprep.subr.bf16.mxu0 %v1489
    %1513 = vmatpush1.bf16.msra.mxu0 %v1488
    %1514 = vmatprep.subr.bf16.mxu0 %v1491
    %1515 = vmatpush1.bf16.msra.mxu0 %v1490
    %1516 = vmatprep.subr.bf16.mxu0 %v1493
    %1517 = vmatpush1.bf16.msra.mxu0 %v1492
    %1518 = vmatprep.subr.bf16.mxu0 %v1495
    %1519 = vmatpush1.bf16.msra.mxu0 %v1494
    %1520 = vmatprep.subr.bf16.mxu0 %v1497
    %1521 = vmatpush1.bf16.msra.mxu0 %v1496
    %1522 = vmatprep.subr.bf16.mxu0 %v1499
    %1523 = vmatpush1.bf16.msra.mxu0 %v1498
    %1524 = vmatprep.subr.bf16.mxu0 %v1501
    %1525 = vmatpush1.bf16.msra.mxu0 %v1500
    %1526 = vmatprep.subr.bf16.mxu0 0
    %1527 = vmatpush1.bf16.msra.mxu0 0
    %1528 = vmatprep.subr.bf16.mxu0 0
    %1529 = vmatpush1.bf16.msra.mxu0 0
    %1530 = vmatprep.subr.bf16.mxu0 0
    %1531 = vmatpush1.bf16.msra.mxu0 0
    %1532 = vmatprep.subr.bf16.mxu0 0
    %1533 = vmatpush1.bf16.msra.mxu0 0
    %1534 = vmatprep.subr.bf16.mxu0 0
    %1535 = vmatpush1.bf16.msra.mxu0 0
    %1536 = vmatprep.subr.bf16.mxu0 0
    %1537 = vmatpush1.bf16.msra.mxu0 0
    %1538 = vmatprep.subr.bf16.mxu0 0
    %1539 = vmatpush1.bf16.msra.mxu0 0
    %1540 = vmatprep.subr.bf16.mxu0 0
    %1541 = vmatpush1.bf16.msra.mxu0 0
    %1542 = vmatprep.mubr.bf16.mxu0 0
    %1543 = vmatmul.mubr.bf16.gmra.mrb[0].mxu0 %v1508
    %v1544 = vpop.f32.mrb[0].mxu0
    %v1545 = vadd.f32 0.0, %v1544
    %v1546 = vpop.f32.mrb[0].mxu0
    %v1547 = vadd.f32 0.0, %v1546
    %v1548 = vpop.f32.mrb[0].mxu0
    %v1549 = vadd.f32 0.0, %v1548
    %v1550 = vpop.f32.mrb[0].mxu0
    %v1551 = vadd.f32 0.0, %v1550
    %1552 = vdwg.mxu0
    %1553 = vst [vmem:[#allocation2] sm:$0xff] %v1545
    %1554 = vst [vmem:[#allocation2 + $0x8] sm:$0xff] %v1547
    %1555 = vst [vmem:[#allocation2 + $0x10] sm:$0xff] %v1549
    %1556 = vst [vmem:[#allocation2 + $0x18] sm:$0xff] %v1551
    // Predicated region
    $region26: #{tpu_custom_call.1} parent=1 // pred_check
      _
    $region27: #{tpu_custom_call.1} parent=1 // pred_check_branch
      %1558 = sbr.rel (0) target = $region29
    $region28: #{tpu_custom_call.1} parent=1 // pred_region
      %s1560 = ssub.s32 512, 512
      %1561 = vsyncadd [#allocation3], %s1560
      %s1562 = sshll.u32 [#allocation2], 4
      %s1563 = int_to_ptr.vmem [resolvable:$true] %s1562
      %1568 = dma.vmem_to_hbm [thread:$0]  %s1563, 512, %s6, [#allocation3], 256, 256, 16
    $region29: #{tpu_custom_call.1} parent=1 // pred_fallthru
      _
    // Predicated region
    $region30: #{tpu_custom_call.1} parent=1 // pred_check
      _
    $region31: #{tpu_custom_call.1} parent=1 // pred_check_branch
      %1570 = sbr.rel (0) target = $region33
    $region32: #{tpu_custom_call.1} parent=1 // pred_region
      %1571 = dma.done [#allocation3], 512
    $region33: #{tpu_custom_call.1} parent=1 // pred_fallthru
      _
    %1572 = vsyncpa [#allocation3], 1

</llo_original>
